<compile_context>
chip_gen: v5e
topology: v5e:2x2
jax: 0.10.0
libtpu: 0.0.40
codegen_flags: <defaults>
</compile_context>

<pallas_src>
import functools

import numpy as np
import jax
import jax.numpy as jnp
from jax import lax
from jax.experimental import pallas as pl
from jax.experimental.pallas import tpu as pltpu


def _fused_up_conv_kernel(x_ref, w_ref, r_ref, rb_ref, g_ref, b_ref, out_ref,
                          sum_ref, sq_ref, *, minv, eps):
    # x_ref:   (H+2, Wp*Cin)   zero-padded NHWC rows of one batch, (w, c) in lanes
    # w_ref:   (3, Wp*Cin, L)  banded, phase-folded conv weights (one per 3x3 row tap)
    # r_ref:   (L, Cout)       one-hot lane -> channel reduction matrix
    # rb_ref:  (Cout, L)       one-hot channel -> lane broadcast matrix
    # g_ref:   (1, Cout)       BN gamma
    # b_ref:   (1, Cout)       BN beta
    # out_ref: (N, H, L)       resident output: staged conv, then normalized in place
    # sum_ref/sq_ref: (1, L)   running per-lane sum / sum-of-squares
    n = pl.program_id(0)
    num_n = pl.num_programs(0)
    H = out_ref.shape[1]

    @pl.when(n == 0)
    def _init():
        sum_ref[...] = jnp.zeros_like(sum_ref)
        sq_ref[...] = jnp.zeros_like(sq_ref)

    # conv3x3(upsample2x(x)) for this batch: 3 banded MXU matmuls, one per row tap.
    # Result is already lane-dense (H, L) with lanes ordered (ph, j, pw, co).
    acc = jnp.dot(x_ref[0:H, :], w_ref[0], preferred_element_type=jnp.float32)
    acc = acc + jnp.dot(x_ref[1:H + 1, :], w_ref[1], preferred_element_type=jnp.float32)
    acc = acc + jnp.dot(x_ref[2:H + 2, :], w_ref[2], preferred_element_type=jnp.float32)

    out_ref[n] = acc
    sum_ref[...] += jnp.sum(acc, axis=0, keepdims=True)
    sq_ref[...] += jnp.sum(acc * acc, axis=0, keepdims=True)

    @pl.when(n == num_n - 1)
    def _finalize():
        # Per-channel batch statistics via one-hot matmuls, fused BN affine + ReLU.
        s_co = jnp.dot(sum_ref[...], r_ref[...], preferred_element_type=jnp.float32)
        q_co = jnp.dot(sq_ref[...], r_ref[...], preferred_element_type=jnp.float32)
        mean = s_co * minv
        var = jnp.maximum(q_co * minv - mean * mean, 0.0)        # biased variance
        scale = g_ref[...] * lax.rsqrt(var + eps)                # (1, Cout)
        shift = b_ref[...] - mean * scale
        scale_l = jnp.dot(scale, rb_ref[...], preferred_element_type=jnp.float32)
        shift_l = jnp.dot(shift, rb_ref[...], preferred_element_type=jnp.float32)
        out_ref[...] = jnp.maximum(out_ref[...] * scale_l + shift_l, 0.0)


@jax.jit
def up_conv_forward(x_nchw, w_oihw, b, gamma, beta):
    """up_conv forward: (N, Cin, H, W) f32 -> (N, Cout, 2H, 2W) f32."""
    del b  # exactly cancelled by the training-mode BN mean subtraction
    N, Cin, H, W = x_nchw.shape
    Cout = w_oihw.shape[0]
    Wp = W + 2
    L = 2 * W * 2 * Cout                       # lanes per conv row: (ph, j, pw, co)
    eps = 1e-5
    minv = 1.0 / float(N * 2 * H * 2 * W)
    hi = jax.lax.Precision.HIGHEST

    # ---- input layout: NHWC, zero pad, fold (w, c) into lanes (tiny, XLA-fused) ----
    x = jnp.transpose(x_nchw, (0, 2, 3, 1)).astype(jnp.float32)
    xp = jnp.pad(x, ((0, 0), (1, 1), (1, 1), (0, 0))).reshape(N, H + 2, Wp * Cin)

    # ---- weights: phase-fold the 2x upsample, then band the W-axis conv ----
    # conv3x3(up2x(x))[2i+ph, 2j+pw, co] = sum_{dh,dw,c} xpad[i+dh, j+dw, c]
    #                                       * w_eff[dh, dw, c, ph, pw, co]
    dh_sel = np.zeros((2, 3, 3), np.float32)   # [ph, kh, dh]
    dw_sel = np.zeros((2, 3, 3), np.float32)   # [pw, kw, dw]
    for p in range(2):
        for k in range(3):
            dh_sel[p, k, (p + k - 1) // 2 + 1] = 1.0
            dw_sel[p, k, (p + k - 1) // 2 + 1] = 1.0
    band_sel = np.zeros((Wp, 3, W), np.float32)  # [jw, dw, j]: 1 iff jw == j + dw
    for dw in range(3):
        band_sel[np.arange(W) + dw, dw, np.arange(W)] = 1.0

    w_hwio = jnp.transpose(w_oihw, (2, 3, 1, 0)).astype(jnp.float32)   # (kh,kw,Cin,Cout)
    w_eff = jnp.einsum('pkd,qle,klco->decpqo', dh_sel, dw_sel, w_hwio, precision=hi)
    # banded weights: rows = (jw, c), lanes = (ph, j, pw, co); one matrix per row tap dh.
    w_band = jnp.einsum('wej,decpqo->dwcpjqo', band_sel, w_eff,
                        precision=hi).reshape(3, Wp * Cin, L)

    # ---- constant one-hot lane<->channel maps (compile-time folded) ----
    lane_co = np.arange(L) % Cout
    r_mat = jnp.asarray((lane_co[:, None] == np.arange(Cout)[None, :]).astype(np.float32))
    rb_mat = jnp.asarray((np.arange(Cout)[:, None] == lane_co[None, :]).astype(np.float32))

    gamma2 = gamma.reshape(1, Cout).astype(jnp.float32)
    beta2 = beta.reshape(1, Cout).astype(jnp.float32)

    kernel = functools.partial(_fused_up_conv_kernel, minv=minv, eps=eps)

    out = pl.pallas_call(
        kernel,
        grid=(N,),
        out_shape=jax.ShapeDtypeStruct((N, H, L), jnp.float32),
        in_specs=[
            pl.BlockSpec((None, H + 2, Wp * Cin), lambda n: (n, 0, 0)),
            pl.BlockSpec((3, Wp * Cin, L), lambda n: (0, 0, 0)),
            pl.BlockSpec((L, Cout), lambda n: (0, 0)),
            pl.BlockSpec((Cout, L), lambda n: (0, 0)),
            pl.BlockSpec((1, Cout), lambda n: (0, 0)),
            pl.BlockSpec((1, Cout), lambda n: (0, 0)),
        ],
        out_specs=pl.BlockSpec((N, H, L), lambda n: (0, 0, 0)),
        scratch_shapes=[
            pltpu.VMEM((1, L), jnp.float32),   # running sum
            pltpu.VMEM((1, L), jnp.float32),   # running sum of squares
        ],
        compiler_params=pltpu.CompilerParams(
            # Batch axis is a sequential reduction: BN needs the global mean/var.
            dimension_semantics=("arbitrary",)),
    )(xp, w_band, r_mat, rb_mat, gamma2, beta2)

    # (N, H, L) -> (N, 2H, 2W, Cout) is a pure bitcast given the (ph, j, pw, co) lane
    # order; the final NHWC -> NCHW transpose is required by the module interface.
    out_nhwc = out.reshape(N, 2 * H, 2 * W, Cout)
    return jnp.transpose(out_nhwc, (0, 3, 1, 2))


def up_conv_reference(x_nchw, w_oihw, b, gamma, beta):
    """Pure-JAX reference mirroring the PyTorch module (training-mode BN)."""
    x = jnp.transpose(x_nchw, (0, 2, 3, 1))
    up = jnp.repeat(jnp.repeat(x, 2, axis=1), 2, axis=2)
    w_hwio = jnp.transpose(w_oihw, (2, 3, 1, 0))
    conv = lax.conv_general_dilated(
        up, w_hwio, window_strides=(1, 1), padding=((1, 1), (1, 1)),
        dimension_numbers=("NHWC", "HWIO", "NHWC")) + b
    mean = jnp.mean(conv, axis=(0, 1, 2), keepdims=True)
    var = jnp.mean(jnp.square(conv - mean), axis=(0, 1, 2), keepdims=True)
    out = (conv - mean) * lax.rsqrt(var + 1e-5) * gamma + beta
    out = jnp.maximum(out, 0.0)
    return jnp.transpose(out, (0, 3, 1, 2))


if __name__ == "__main__":
    # Module config: up_conv(inChannl=4, outChannal=8, kernelSize=3)
    N, Cin, H, W = 2, 4, 16, 16
    Cout, K = 8, 3

    key = jax.random.PRNGKey(0)
    kx, kw, kb = jax.random.split(key, 3)

    x = jax.random.normal(kx, (N, Cin, H, W), dtype=jnp.float32)

    fan_in = Cin * K * K
    bound = 1.0 / jnp.sqrt(jnp.float32(fan_in))
    w = jax.random.uniform(kw, (Cout, Cin, K, K), jnp.float32, -bound, bound)
    b = jax.random.uniform(kb, (Cout,), jnp.float32, -bound, bound)
    gamma = jnp.ones((Cout,), jnp.float32)   # BatchNorm2d default init
    beta = jnp.zeros((Cout,), jnp.float32)

    out = up_conv_forward(x, w, b, gamma, beta)
    out = jax.block_until_ready(out)
    assert out.shape == (N, Cout, 2 * H, 2 * W), out.shape

    ref = jax.block_until_ready(up_conv_reference(x, w, b, gamma, beta))
    assert jnp.allclose(out, ref, rtol=1e-4, atol=1e-4), \
        float(jnp.max(jnp.abs(out - ref)))

    print("KERNEL_OK")
</pallas_src>

<mosaic_0001>
module attributes {stable_mosaic.version = 11 : i64} {
  func.func @_fused_up_conv_kernel(%arg0: i32, %arg1: memref<1x18x72xf32, #tpu.memory_space<vmem>>, %arg2: memref<3x72x512xf32, #tpu.memory_space<vmem>>, %arg3: memref<512x8xf32, #tpu.memory_space<vmem>>, %arg4: memref<8x512xf32, #tpu.memory_space<vmem>>, %arg5: memref<1x8xf32, #tpu.memory_space<vmem>>, %arg6: memref<1x8xf32, #tpu.memory_space<vmem>>, %arg7: memref<2x16x512xf32, #tpu.memory_space<vmem>>, %arg8: memref<1x512xf32, #tpu.memory_space<vmem>>, %arg9: memref<1x512xf32, #tpu.memory_space<vmem>>) attributes {dimension_semantics = [#tpu.dimension_semantics<arbitrary>], iteration_bounds = array<i64: 2>, scalar_prefetch = 0 : i64, scratch_operands = 2 : i64, tpu.core_type = #tpu.core_type<tc>, window_params = [{transform_indices = @transform_0, window_bounds = array<i64: 1, 18, 72>}, {pipeline_mode = #tpu.pipeline_mode<synchronous>, transform_indices = @transform_1, window_bounds = array<i64: 3, 72, 512>}, {pipeline_mode = #tpu.pipeline_mode<synchronous>, transform_indices = @transform_2, window_bounds = array<i64: 512, 8>}, {pipeline_mode = #tpu.pipeline_mode<synchronous>, transform_indices = @transform_3, window_bounds = array<i64: 8, 512>}, {pipeline_mode = #tpu.pipeline_mode<synchronous>, transform_indices = @transform_4, window_bounds = array<i64: 1, 8>}, {pipeline_mode = #tpu.pipeline_mode<synchronous>, transform_indices = @transform_5, window_bounds = array<i64: 1, 8>}, {pipeline_mode = #tpu.pipeline_mode<synchronous>, transform_indices = @transform_6, window_bounds = array<i64: 2, 16, 512>}]} {
    %c0_i32 = arith.constant 0 : i32
    %0 = arith.cmpi eq, %arg0, %c0_i32 : i32
    %1 = arith.extui %0 : i1 to i32
    %c0_i32_0 = arith.constant 0 : i32
    %2 = arith.cmpi ne, %1, %c0_i32_0 : i32
    scf.if %2 {
      %cst_31 = arith.constant 0.000000e+00 : f32
      %38 = vector.broadcast %cst_31 : f32 to vector<1x512xf32>
      %c0_32 = arith.constant 0 : index
      %c0_33 = arith.constant 0 : index
      %39 = vector.load %arg8[%c0_32, %c0_33] : memref<1x512xf32, #tpu.memory_space<vmem>>, vector<1x512xf32>
      tpu.vector_store %arg8[%c0_32, %c0_33], %38 {strides = array<i32>} : memref<1x512xf32, #tpu.memory_space<vmem>>, vector<1x512xf32>,
      %cst_34 = arith.constant 0.000000e+00 : f32
      %40 = vector.broadcast %cst_34 : f32 to vector<1x512xf32>
      %c0_35 = arith.constant 0 : index
      %c0_36 = arith.constant 0 : index
      %41 = vector.load %arg9[%c0_35, %c0_36] : memref<1x512xf32, #tpu.memory_space<vmem>>, vector<1x512xf32>
      tpu.vector_store %arg9[%c0_35, %c0_36], %40 {strides = array<i32>} : memref<1x512xf32, #tpu.memory_space<vmem>>, vector<1x512xf32>,
    } else {
    }
    %c0 = arith.constant 0 : index
    %c0_1 = arith.constant 0 : index
    %c0_2 = arith.constant 0 : index
    %3 = vector.load %arg1[%c0, %c0_1, %c0_2] : memref<1x18x72xf32, #tpu.memory_space<vmem>>, vector<1x16x72xf32>
    %4 = vector.shape_cast %3 : vector<1x16x72xf32> to vector<16x72xf32>
    %c0_3 = arith.constant 0 : index
    %c0_4 = arith.constant 0 : index
    %c0_5 = arith.constant 0 : index
    %5 = vector.load %arg2[%c0_3, %c0_4, %c0_5] : memref<3x72x512xf32, #tpu.memory_space<vmem>>, vector<1x72x512xf32>
    %6 = vector.shape_cast %5 : vector<1x72x512xf32> to vector<72x512xf32>
    %cst = arith.constant dense<0.000000e+00> : vector<16x512xf32>
    %7 = tpu.matmul %4, %6, %cst {dimension_numbers = #tpu.dot_dimension_numbers<[1], [0], [0], [1], [0, 0, 1, 1], [], []>} : vector<16x72xf32>, vector<72x512xf32>, vector<16x512xf32> -> vector<16x512xf32>
    %c0_6 = arith.constant 0 : index
    %c1 = arith.constant 1 : index
    %c0_7 = arith.constant 0 : index
    %8 = vector.load %arg1[%c0_6, %c1, %c0_7] : memref<1x18x72xf32, #tpu.memory_space<vmem>>, vector<1x16x72xf32>
    %9 = vector.shape_cast %8 : vector<1x16x72xf32> to vector<16x72xf32>
    %c1_8 = arith.constant 1 : index
    %c0_9 = arith.constant 0 : index
    %c0_10 = arith.constant 0 : index
    %10 = vector.load %arg2[%c1_8, %c0_9, %c0_10] : memref<3x72x512xf32, #tpu.memory_space<vmem>>, vector<1x72x512xf32>
    %11 = vector.shape_cast %10 : vector<1x72x512xf32> to vector<72x512xf32>
    %cst_11 = arith.constant dense<0.000000e+00> : vector<16x512xf32>
    %12 = tpu.matmul %9, %11, %cst_11 {dimension_numbers = #tpu.dot_dimension_numbers<[1], [0], [0], [1], [0, 0, 1, 1], [], []>} : vector<16x72xf32>, vector<72x512xf32>, vector<16x512xf32> -> vector<16x512xf32>
    %13 = arith.addf %7, %12 : vector<16x512xf32>
    %c0_12 = arith.constant 0 : index
    %c2 = arith.constant 2 : index
    %c0_13 = arith.constant 0 : index
    %14 = vector.load %arg1[%c0_12, %c2, %c0_13] : memref<1x18x72xf32, #tpu.memory_space<vmem>>, vector<1x16x72xf32>
    %15 = vector.shape_cast %14 : vector<1x16x72xf32> to vector<16x72xf32>
    %c2_14 = arith.constant 2 : index
    %c0_15 = arith.constant 0 : index
    %c0_16 = arith.constant 0 : index
    %16 = vector.load %arg2[%c2_14, %c0_15, %c0_16] : memref<3x72x512xf32, #tpu.memory_space<vmem>>, vector<1x72x512xf32>
    %17 = vector.shape_cast %16 : vector<1x72x512xf32> to vector<72x512xf32>
    %cst_17 = arith.constant dense<0.000000e+00> : vector<16x512xf32>
    %18 = tpu.matmul %15, %17, %cst_17 {dimension_numbers = #tpu.dot_dimension_numbers<[1], [0], [0], [1], [0, 0, 1, 1], [], []>} : vector<16x72xf32>, vector<72x512xf32>, vector<16x512xf32> -> vector<16x512xf32>
    %19 = arith.addf %13, %18 : vector<16x512xf32>
    %20 = arith.index_cast %arg0 : i32 to index
    %c0_18 = arith.constant 0 : index
    %c0_19 = arith.constant 0 : index
    %21 = vector.load %arg7[%20, %c0_18, %c0_19] : memref<2x16x512xf32, #tpu.memory_space<vmem>>, vector<1x16x512xf32>
    %22 = vector.shape_cast %21 : vector<1x16x512xf32> to vector<16x512xf32>
    %23 = vector.shape_cast %19 : vector<16x512xf32> to vector<1x16x512xf32>
    tpu.vector_store %arg7[%20, %c0_18, %c0_19], %23 {strides = array<i32>} : memref<2x16x512xf32, #tpu.memory_space<vmem>>, vector<1x16x512xf32>,
    %c0_20 = arith.constant 0 : index
    %c0_21 = arith.constant 0 : index
    %24 = vector.load %arg8[%c0_20, %c0_21] : memref<1x512xf32, #tpu.memory_space<vmem>>, vector<1x512xf32>
    %cst_22 = arith.constant dense<0.000000e+00> : vector<512xf32>
    %25 = vector.multi_reduction <add>, %19, %cst_22 [0] : vector<16x512xf32> to vector<512xf32>
    %26 = vector.shape_cast %25 : vector<512xf32> to vector<1x512xf32>
    %27 = arith.addf %24, %26 : vector<1x512xf32>
    %c0_23 = arith.constant 0 : index
    %c0_24 = arith.constant 0 : index
    %28 = vector.load %arg8[%c0_23, %c0_24] : memref<1x512xf32, #tpu.memory_space<vmem>>, vector<1x512xf32>
    tpu.vector_store %arg8[%c0_23, %c0_24], %27 {strides = array<i32>} : memref<1x512xf32, #tpu.memory_space<vmem>>, vector<1x512xf32>,
    %c0_25 = arith.constant 0 : index
    %c0_26 = arith.constant 0 : index
    %29 = vector.load %arg9[%c0_25, %c0_26] : memref<1x512xf32, #tpu.memory_space<vmem>>, vector<1x512xf32>
    %30 = arith.mulf %19, %19 : vector<16x512xf32>
    %cst_27 = arith.constant dense<0.000000e+00> : vector<512xf32>
    %31 = vector.multi_reduction <add>, %30, %cst_27 [0] : vector<16x512xf32> to vector<512xf32>
    %32 = vector.shape_cast %31 : vector<512xf32> to vector<1x512xf32>
    %33 = arith.addf %29, %32 : vector<1x512xf32>
    %c0_28 = arith.constant 0 : index
    %c0_29 = arith.constant 0 : index
    %34 = vector.load %arg9[%c0_28, %c0_29] : memref<1x512xf32, #tpu.memory_space<vmem>>, vector<1x512xf32>
    tpu.vector_store %arg9[%c0_28, %c0_29], %33 {strides = array<i32>} : memref<1x512xf32, #tpu.memory_space<vmem>>, vector<1x512xf32>,
    %c1_i32 = arith.constant 1 : i32
    %35 = arith.cmpi eq, %arg0, %c1_i32 : i32
    %36 = arith.extui %35 : i1 to i32
    %c0_i32_30 = arith.constant 0 : i32
    %37 = arith.cmpi ne, %36, %c0_i32_30 : i32
    scf.if %37 {
      %c0_31 = arith.constant 0 : index
      %c0_32 = arith.constant 0 : index
      %38 = vector.load %arg8[%c0_31, %c0_32] : memref<1x512xf32, #tpu.memory_space<vmem>>, vector<1x512xf32>
      %c0_33 = arith.constant 0 : index
      %c0_34 = arith.constant 0 : index
      %39 = vector.load %arg3[%c0_33, %c0_34] : memref<512x8xf32, #tpu.memory_space<vmem>>, vector<512x8xf32>
      %cst_35 = arith.constant dense<0.000000e+00> : vector<1x8xf32>
      %40 = tpu.matmul %38, %39, %cst_35 {dimension_numbers = #tpu.dot_dimension_numbers<[1], [0], [0], [1], [0, 0, 1, 1], [], []>} : vector<1x512xf32>, vector<512x8xf32>, vector<1x8xf32> -> vector<1x8xf32>
      %c0_36 = arith.constant 0 : index
      %c0_37 = arith.constant 0 : index
      %41 = vector.load %arg9[%c0_36, %c0_37] : memref<1x512xf32, #tpu.memory_space<vmem>>, vector<1x512xf32>
      %c0_38 = arith.constant 0 : index
      %c0_39 = arith.constant 0 : index
      %42 = vector.load %arg3[%c0_38, %c0_39] : memref<512x8xf32, #tpu.memory_space<vmem>>, vector<512x8xf32>
      %cst_40 = arith.constant dense<0.000000e+00> : vector<1x8xf32>
      %43 = tpu.matmul %41, %42, %cst_40 {dimension_numbers = #tpu.dot_dimension_numbers<[1], [0], [0], [1], [0, 0, 1, 1], [], []>} : vector<1x512xf32>, vector<512x8xf32>, vector<1x8xf32> -> vector<1x8xf32>
      %cst_41 = arith.constant 4.8828125E-4 : f32
      %44 = vector.broadcast %cst_41 : f32 to vector<1x8xf32>
      %45 = arith.mulf %40, %44 : vector<1x8xf32>
      %cst_42 = arith.constant 4.8828125E-4 : f32
      %46 = vector.broadcast %cst_42 : f32 to vector<1x8xf32>
      %47 = arith.mulf %43, %46 : vector<1x8xf32>
      %48 = arith.mulf %45, %45 : vector<1x8xf32>
      %49 = arith.subf %47, %48 : vector<1x8xf32>
      %cst_43 = arith.constant 0.000000e+00 : f32
      %50 = vector.broadcast %cst_43 : f32 to vector<1x8xf32>
      %51 = arith.maximumf %49, %50 : vector<1x8xf32>
      %c0_44 = arith.constant 0 : index
      %c0_45 = arith.constant 0 : index
      %52 = vector.load %arg5[%c0_44, %c0_45] : memref<1x8xf32, #tpu.memory_space<vmem>>, vector<1x8xf32>
      %cst_46 = arith.constant 9.99999974E-6 : f32
      %53 = vector.broadcast %cst_46 : f32 to vector<1x8xf32>
      %54 = arith.addf %51, %53 : vector<1x8xf32>
      %55 = math.rsqrt %54 : vector<1x8xf32>
      %56 = arith.mulf %52, %55 : vector<1x8xf32>
      %c0_47 = arith.constant 0 : index
      %c0_48 = arith.constant 0 : index
      %57 = vector.load %arg6[%c0_47, %c0_48] : memref<1x8xf32, #tpu.memory_space<vmem>>, vector<1x8xf32>
      %58 = arith.mulf %45, %56 : vector<1x8xf32>
      %59 = arith.subf %57, %58 : vector<1x8xf32>
      %c0_49 = arith.constant 0 : index
      %c0_50 = arith.constant 0 : index
      %60 = vector.load %arg4[%c0_49, %c0_50] : memref<8x512xf32, #tpu.memory_space<vmem>>, vector<8x512xf32>
      %cst_51 = arith.constant dense<0.000000e+00> : vector<1x512xf32>
      %61 = tpu.matmul %56, %60, %cst_51 {dimension_numbers = #tpu.dot_dimension_numbers<[1], [0], [0], [1], [0, 0, 1, 1], [], []>} : vector<1x8xf32>, vector<8x512xf32>, vector<1x512xf32> -> vector<1x512xf32>
      %c0_52 = arith.constant 0 : index
      %c0_53 = arith.constant 0 : index
      %62 = vector.load %arg4[%c0_52, %c0_53] : memref<8x512xf32, #tpu.memory_space<vmem>>, vector<8x512xf32>
      %cst_54 = arith.constant dense<0.000000e+00> : vector<1x512xf32>
      %63 = tpu.matmul %59, %62, %cst_54 {dimension_numbers = #tpu.dot_dimension_numbers<[1], [0], [0], [1], [0, 0, 1, 1], [], []>} : vector<1x8xf32>, vector<8x512xf32>, vector<1x512xf32> -> vector<1x512xf32>
      %c0_55 = arith.constant 0 : index
      %c0_56 = arith.constant 0 : index
      %c0_57 = arith.constant 0 : index
      %64 = vector.load %arg7[%c0_55, %c0_56, %c0_57] : memref<2x16x512xf32, #tpu.memory_space<vmem>>, vector<2x16x512xf32>
      %65 = vector.shape_cast %61 : vector<1x512xf32> to vector<1x1x512xf32>
      %66 = vector.broadcast %65 : vector<1x1x512xf32> to vector<2x16x512xf32>
      %67 = arith.mulf %64, %66 : vector<2x16x512xf32>
      %68 = vector.shape_cast %63 : vector<1x512xf32> to vector<1x1x512xf32>
      %69 = vector.broadcast %68 : vector<1x1x512xf32> to vector<2x16x512xf32>
      %70 = arith.addf %67, %69 : vector<2x16x512xf32>
      %cst_58 = arith.constant 0.000000e+00 : f32
      %71 = vector.broadcast %cst_58 : f32 to vector<2x16x512xf32>
      %72 = arith.maximumf %70, %71 : vector<2x16x512xf32>
      %c0_59 = arith.constant 0 : index
      %c0_60 = arith.constant 0 : index
      %c0_61 = arith.constant 0 : index
      %73 = vector.load %arg7[%c0_59, %c0_60, %c0_61] : memref<2x16x512xf32, #tpu.memory_space<vmem>>, vector<2x16x512xf32>
      tpu.vector_store %arg7[%c0_59, %c0_60, %c0_61], %72 {strides = array<i32>} : memref<2x16x512xf32, #tpu.memory_space<vmem>>, vector<2x16x512xf32>,
    } else {
    }
    return
  }
  func.func @transform_0(%arg0: i32) -> (i32, i32, i32) {
    %c0_i32 = arith.constant 0 : i32
    %c0_i32_0 = arith.constant 0 : i32
    %c0_i32_1 = arith.constant 0 : i32
    return %arg0, %c0_i32, %c0_i32_0 : i32, i32, i32
  }
  func.func @transform_1(%arg0: i32) -> (i32, i32, i32) {
    %c0_i32 = arith.constant 0 : i32
    %c0_i32_0 = arith.constant 0 : i32
    %c0_i32_1 = arith.constant 0 : i32
    %c0_i32_2 = arith.constant 0 : i32
    return %c0_i32, %c0_i32_0, %c0_i32_1 : i32, i32, i32
  }
  func.func @transform_2(%arg0: i32) -> (i32, i32) {
    %c0_i32 = arith.constant 0 : i32
    %c0_i32_0 = arith.constant 0 : i32
    %c0_i32_1 = arith.constant 0 : i32
    return %c0_i32, %c0_i32_0 : i32, i32
  }
  func.func @transform_3(%arg0: i32) -> (i32, i32) {
    %c0_i32 = arith.constant 0 : i32
    %c0_i32_0 = arith.constant 0 : i32
    %c0_i32_1 = arith.constant 0 : i32
    return %c0_i32, %c0_i32_0 : i32, i32
  }
  func.func @transform_4(%arg0: i32) -> (i32, i32) {
    %c0_i32 = arith.constant 0 : i32
    %c0_i32_0 = arith.constant 0 : i32
    %c0_i32_1 = arith.constant 0 : i32
    return %c0_i32, %c0_i32_0 : i32, i32
  }
  func.func @transform_5(%arg0: i32) -> (i32, i32) {
    %c0_i32 = arith.constant 0 : i32
    %c0_i32_0 = arith.constant 0 : i32
    %c0_i32_1 = arith.constant 0 : i32
    return %c0_i32, %c0_i32_0 : i32, i32
  }
  func.func @transform_6(%arg0: i32) -> (i32, i32, i32) {
    %c0_i32 = arith.constant 0 : i32
    %c0_i32_0 = arith.constant 0 : i32
    %c0_i32_1 = arith.constant 0 : i32
    %c0_i32_2 = arith.constant 0 : i32
    return %c0_i32, %c0_i32_0, %c0_i32_1 : i32, i32, i32
  }
}

</mosaic_0001>

<llo_original>
// kernel: up_conv_forward.1
$region0: #{up_conv_forward.1}
  #allocation0 [shape = 'u32[]', space=smem, size = 0x4, offset = 0x4, fixed_abs, tag = 'smem constant byte address 0x4 - core index']
  #allocation1 [shape = 'u32[72,128]{1,0:T(1,128)}', space=vmem, size = 0x9000, scoped, tag = 'internal scratch']
  #allocation2 [shape = 'f32[1,512]{1,0:T(1,128)}', space=vmem, size = 0x800, scoped, tag = 'scratch operand']
  #allocation3 [shape = 'f32[1,512]{1,0:T(1,128)}', space=vmem, size = 0x800, scoped, tag = 'scratch operand']
  %s0 = inlined_call_operand.vmem [shape: f32[2,18,72], index: 0, kind: input, shape index: {}]
  %s1 = inlined_call_operand.vmem [shape: f32[3,72,512], index: 1, kind: input, shape index: {}]
  %s2 = inlined_call_operand.vmem [shape: f32[512,8], index: 2, kind: input, shape index: {}]
  %s3 = inlined_call_operand.vmem [shape: f32[8,512], index: 3, kind: input, shape index: {}]
  %s4 = inlined_call_operand.vmem [shape: f32[1,8], index: 4, kind: input, shape index: {}]
  %s5 = inlined_call_operand.vmem [shape: f32[1,8], index: 5, kind: input, shape index: {}]
  %s6 = inlined_call_operand.vmem [shape: f32[2,16,512], index: 6, kind: output, shape index: {}]
  %s7 = sld [smem:[#allocation0]]
  $region65: #{up_conv_forward.1} parent=0
    _
  %s9 = ssub.s32 1, %s7
  %s10 = scalar_select 0, %s9, %s7
  loop: start=0, step=1, limit=4
  $region2: #{up_conv_forward.1} parent=0 // loop_pre_header
    _
  $region3: #{up_conv_forward.1} parent=0 // loop_header
    %s12 = sphi 0, %s16
    %p13 = scmp.ge.s32.totalorder %s12, 4
    %s22 = sphi 0, %s24
    %s25 = sphi 0, %s22
    %s26 = sphi 0, %s25
    %s42 = sphi 0, %s26
    %s46 = sphi 0, %s46
    %s48 = sphi 0, %s46
    %s49 = sphi 0, %s48
    %s63 = sphi 0, %s49
    %s67 = sphi 0, %s67
    %s69 = sphi 0, %s67
    %s70 = sphi 0, %s69
    %s84 = sphi 0, %s70
    %s88 = sphi 0, %s88
    %s90 = sphi 0, %s88
    %s91 = sphi 0, %s90
    %s105 = sphi 0, %s91
    %s109 = sphi 0, %s109
    %s111 = sphi 0, %s109
    %s112 = sphi 0, %s111
    %s126 = sphi 0, %s112
    %s130 = sphi 0, %s130
    %s132 = sphi 0, %s130
    %s133 = sphi 0, %s132
    %s147 = sphi 0, %s133
    %s151 = sphi 0, %s151
    %s153 = sphi 0, %s151
    %s154 = sphi 0, %s153
    %s168 = sphi 0, %s154
  $region4: #{up_conv_forward.1} parent=0 // loop_header_branch
    %15 = sbr.rel (%p13) target = $region8
  $region5: #{up_conv_forward.1} parent=0 // loop_body
    %s17 = ssub.s32 %s12, 1
    %s18 = ssub.s32 %s12, 2
    %s19 = sadd.s32 %s12, 1
    %s20 = ssub.s32 %s12, %s19
    %p21 = scmp.eq.s32.totalorder %s20, 0
    %s23 = sadd.s32 %s22, 1
    %s24 = scalar_select %p21, %s22, %s23
    %p27 = pneg %p21
    %p28 = scmp.eq.s32.totalorder %s12, 1
    %p29 = por %p27, %p28
    %p30 = scmp.ne.s32.totalorder %s22, %s25
    %p31 = scmp.eq.s32.totalorder %s12, 0
    %p32 = por %p30, %p31
    %p33 = scmp.ne.s32.totalorder %s22, %s25
    %p34 = scmp.eq.s32.totalorder %s17, 1
    %p35 = por %p33, %p34
    %p36 = scmp.ne.s32.totalorder %s25, %s26
    %p37 = scmp.eq.s32.totalorder %s17, 0
    %p38 = por %p36, %p37
    %p39 = scmp.ne.s32.totalorder %s25, %s26
    %p40 = scmp.eq.s32.totalorder %s18, 1
    %p41 = por %p39, %p40
    %p43 = scmp.ne.s32.totalorder %s26, %s42
    %p44 = scmp.eq.s32.totalorder %s18, 0
    %p45 = por %p43, %p44
    %s47 = sadd.s32 %s46, 1
    %p50 = scmp.eq.s32.totalorder %s12, 1
    %p51 = scmp.ne.s32.totalorder %s46, %s48
    %p52 = scmp.eq.s32.totalorder %s12, 0
    %p53 = por %p51, %p52
    %p54 = scmp.ne.s32.totalorder %s46, %s48
    %p55 = scmp.eq.s32.totalorder %s17, 1
    %p56 = por %p54, %p55
    %p57 = scmp.ne.s32.totalorder %s48, %s49
    %p58 = scmp.eq.s32.totalorder %s17, 0
    %p59 = por %p57, %p58
    %p60 = scmp.ne.s32.totalorder %s48, %s49
    %p61 = scmp.eq.s32.totalorder %s18, 1
    %p62 = por %p60, %p61
    %p64 = scmp.ne.s32.totalorder %s49, %s63
    %p65 = scmp.eq.s32.totalorder %s18, 0
    %p66 = por %p64, %p65
    %s68 = sadd.s32 %s67, 1
    %p71 = scmp.eq.s32.totalorder %s12, 1
    %p72 = scmp.ne.s32.totalorder %s67, %s69
    %p73 = scmp.eq.s32.totalorder %s12, 0
    %p74 = por %p72, %p73
    %p75 = scmp.ne.s32.totalorder %s67, %s69
    %p76 = scmp.eq.s32.totalorder %s17, 1
    %p77 = por %p75, %p76
    %p78 = scmp.ne.s32.totalorder %s69, %s70
    %p79 = scmp.eq.s32.totalorder %s17, 0
    %p80 = por %p78, %p79
    %p81 = scmp.ne.s32.totalorder %s69, %s70
    %p82 = scmp.eq.s32.totalorder %s18, 1
    %p83 = por %p81, %p82
    %p85 = scmp.ne.s32.totalorder %s70, %s84
    %p86 = scmp.eq.s32.totalorder %s18, 0
    %p87 = por %p85, %p86
    %s89 = sadd.s32 %s88, 1
    %p92 = scmp.eq.s32.totalorder %s12, 1
    %p93 = scmp.ne.s32.totalorder %s88, %s90
    %p94 = scmp.eq.s32.totalorder %s12, 0
    %p95 = por %p93, %p94
    %p96 = scmp.ne.s32.totalorder %s88, %s90
    %p97 = scmp.eq.s32.totalorder %s17, 1
    %p98 = por %p96, %p97
    %p99 = scmp.ne.s32.totalorder %s90, %s91
    %p100 = scmp.eq.s32.totalorder %s17, 0
    %p101 = por %p99, %p100
    %p102 = scmp.ne.s32.totalorder %s90, %s91
    %p103 = scmp.eq.s32.totalorder %s18, 1
    %p104 = por %p102, %p103
    %p106 = scmp.ne.s32.totalorder %s91, %s105
    %p107 = scmp.eq.s32.totalorder %s18, 0
    %p108 = por %p106, %p107
    %s110 = sadd.s32 %s109, 1
    %p113 = scmp.eq.s32.totalorder %s12, 1
    %p114 = scmp.ne.s32.totalorder %s109, %s111
    %p115 = scmp.eq.s32.totalorder %s12, 0
    %p116 = por %p114, %p115
    %p117 = scmp.ne.s32.totalorder %s109, %s111
    %p118 = scmp.eq.s32.totalorder %s17, 1
    %p119 = por %p117, %p118
    %p120 = scmp.ne.s32.totalorder %s111, %s112
    %p121 = scmp.eq.s32.totalorder %s17, 0
    %p122 = por %p120, %p121
    %p123 = scmp.ne.s32.totalorder %s111, %s112
    %p124 = scmp.eq.s32.totalorder %s18, 1
    %p125 = por %p123, %p124
    %p127 = scmp.ne.s32.totalorder %s112, %s126
    %p128 = scmp.eq.s32.totalorder %s18, 0
    %p129 = por %p127, %p128
    %s131 = sadd.s32 %s130, 1
    %p134 = scmp.eq.s32.totalorder %s12, 1
    %p135 = scmp.ne.s32.totalorder %s130, %s132
    %p136 = scmp.eq.s32.totalorder %s12, 0
    %p137 = por %p135, %p136
    %p138 = scmp.ne.s32.totalorder %s130, %s132
    %p139 = scmp.eq.s32.totalorder %s17, 1
    %p140 = por %p138, %p139
    %p141 = scmp.ne.s32.totalorder %s132, %s133
    %p142 = scmp.eq.s32.totalorder %s17, 0
    %p143 = por %p141, %p142
    %p144 = scmp.ne.s32.totalorder %s132, %s133
    %p145 = scmp.eq.s32.totalorder %s18, 1
    %p146 = por %p144, %p145
    %p148 = scmp.ne.s32.totalorder %s133, %s147
    %p149 = scmp.eq.s32.totalorder %s18, 0
    %p150 = por %p148, %p149
    %s152 = sadd.s32 %s151, 1
    %p155 = scmp.eq.s32.totalorder %s12, 1
    %p156 = scmp.ne.s32.totalorder %s151, %s153
    %p157 = scmp.eq.s32.totalorder %s12, 0
    %p158 = por %p156, %p157
    %p159 = scmp.ne.s32.totalorder %s151, %s153
    %p160 = scmp.eq.s32.totalorder %s17, 1
    %p161 = por %p159, %p160
    %p162 = scmp.ne.s32.totalorder %s153, %s154
    %p163 = scmp.eq.s32.totalorder %s17, 0
    %p164 = por %p162, %p163
    %p165 = scmp.ne.s32.totalorder %s153, %s154
    %p166 = scmp.eq.s32.totalorder %s18, 1
    %p167 = por %p165, %p166
    %p169 = scmp.ne.s32.totalorder %s154, %s168
    %p170 = scmp.eq.s32.totalorder %s18, 0
    %p171 = por %p169, %p170
    %p172 = scmp.le.s32.totalorder 1, %s12
    %p173 = scmp.lt.s32.totalorder %s12, 3
    %p174 = pnand %p172, %p173
    %p175 = pneg %p174
    // Predicated region
    $region9: #{up_conv_forward.1} parent=5 // pred_check
      _
    $region10: #{up_conv_forward.1} parent=5 // pred_check_branch
      %177 = sbr.rel (%p174) target = $region12
    $region11: #{up_conv_forward.1} parent=5 // pred_region
      %s178 = ssub.s32 %s12, 1
      // Predicated region
      $region13: #{up_conv_forward.1} parent=11 // pred_check
        %p179 = pneg %p59
      $region14: #{up_conv_forward.1} parent=11 // pred_check_branch
        %181 = sbr.rel (%p179) target = $region16
      $region15: #{up_conv_forward.1} parent=11 // pred_region
        _
      $region16: #{up_conv_forward.1} parent=11 // pred_fallthru
        _
      // Predicated region
      $region17: #{up_conv_forward.1} parent=11 // pred_check
        %p182 = pneg %p80
      $region18: #{up_conv_forward.1} parent=11 // pred_check_branch
        %184 = sbr.rel (%p182) target = $region20
      $region19: #{up_conv_forward.1} parent=11 // pred_region
        _
      $region20: #{up_conv_forward.1} parent=11 // pred_fallthru
        _
      // Predicated region
      $region21: #{up_conv_forward.1} parent=11 // pred_check
        %p185 = pneg %p101
      $region22: #{up_conv_forward.1} parent=11 // pred_check_branch
        %187 = sbr.rel (%p185) target = $region24
      $region23: #{up_conv_forward.1} parent=11 // pred_region
        _
      $region24: #{up_conv_forward.1} parent=11 // pred_fallthru
        _
      // Predicated region
      $region25: #{up_conv_forward.1} parent=11 // pred_check
        %p188 = pneg %p122
      $region26: #{up_conv_forward.1} parent=11 // pred_check_branch
        %190 = sbr.rel (%p188) target = $region28
      $region27: #{up_conv_forward.1} parent=11 // pred_region
        _
      $region28: #{up_conv_forward.1} parent=11 // pred_fallthru
        _
      // Predicated region
      $region29: #{up_conv_forward.1} parent=11 // pred_check
        %p191 = pneg %p143
      $region30: #{up_conv_forward.1} parent=11 // pred_check_branch
        %193 = sbr.rel (%p191) target = $region32
      $region31: #{up_conv_forward.1} parent=11 // pred_region
        _
      $region32: #{up_conv_forward.1} parent=11 // pred_fallthru
        _
    $region12: #{up_conv_forward.1} parent=5 // pred_fallthru
      _
    %p194 = scmp.lt.s32.totalorder %s12, 2
    // Predicated region
    $region33: #{up_conv_forward.1} parent=5 // pred_check
      %p195 = pneg %p194
    $region34: #{up_conv_forward.1} parent=5 // pred_check_branch
      %197 = sbr.rel (%p195) target = $region36
    $region35: #{up_conv_forward.1} parent=5 // pred_region
      // Predicated region
      $region37: #{up_conv_forward.1} parent=35 // pred_check
        %p198 = pneg %p32
      $region38: #{up_conv_forward.1} parent=35 // pred_check_branch
        %200 = sbr.rel (%p198) target = $region40
      $region39: #{up_conv_forward.1} parent=35 // pred_region
        %p201 = scmp.lt.s32.totalorder %s12, 1
        %s202 = scalar_select %p201, %s12, 1
        %s203 = smul.addr %s202, 3
        %s204 = smul.addr %s203, 8
        %s205 = scalar_lea.vmem %s0, %s204
      $region40: #{up_conv_forward.1} parent=35 // pred_fallthru
        _
    $region36: #{up_conv_forward.1} parent=5 // pred_fallthru
      _
    %p206 = scmp.le.s32.totalorder 1, %s12
    %p207 = scmp.lt.s32.totalorder %s12, 3
    %p208 = pnand %p206, %p207
    %p209 = pneg %p208
    // Predicated region
    $region41: #{up_conv_forward.1} parent=5 // pred_check
      _
    $region42: #{up_conv_forward.1} parent=5 // pred_check_branch
      %211 = sbr.rel (%p208) target = $region44
    $region43: #{up_conv_forward.1} parent=5 // pred_region
      %s212 = ssub.s32 %s12, 1
      %p213 = scmp.lt.s32.totalorder %s17, 1
      %s214 = scalar_select %p213, %s17, 1
      %s215 = smul.addr %s214, 3
      %s216 = smul.addr %s215, 8
      %s217 = scalar_lea.vmem %s0, %s216
      %p218 = pneg %p38
      %p219 = pneg %p35
      %p220 = pneg %p59
      %p221 = pneg %p56
      %p222 = pneg %p80
      %p223 = pneg %p77
      %p224 = pneg %p101
      %p225 = pneg %p98
      %p226 = pneg %p122
      %p227 = pneg %p119
      %p228 = pneg %p143
      %p229 = pneg %p140
      %p230 = pneg %p164
      %p231 = pneg %p161
      %p232 = scmp.lt.s32.totalorder %s17, 1
      %s233 = scalar_select %p232, %s17, 1
      %s234 = smul.addr %s233, 3
      %s235 = smul.addr %s234, 8
      %s236 = scalar_lea.vmem %s0, %s235
      %p237 = scmp.eq.s32.totalorder %s17, 0
      // Predicated region
      $region45: #{up_conv_forward.1} parent=43 // pred_check
        %p238 = pneg %p237
      $region46: #{up_conv_forward.1} parent=43 // pred_check_branch
        %240 = sbr.rel (%p238) target = $region48
      $region47: #{up_conv_forward.1} parent=43 // pred_region
        %v241 = vlaneseq
        %vm242 = vcmp.ge.s32.totalorder %v241, 0
        %vm243 = vcmp.lt.s32.totalorder %v241, 512
        %vm244 = vmand %vm242, %vm243
        %245 = vst.msk [vmem:[#allocation2] sm:$0xf] %vm244, 0.0
        %246 = vst.msk [vmem:[#allocation3] sm:$0xf] %vm244, 0.0
      $region48: #{up_conv_forward.1} parent=43 // pred_fallthru
        _
      %v247 = vld [vmem:[%s236] sm:$0xff]
      %v248 = vld [vmem:[%s236 + $0x8] sm:$0xff]
      %v249 = vld [vmem:[%s1] sm:$0xff]
      %v250 = vld [vmem:[%s1 + $0x8] sm:$0xff]
      %v251 = vld [vmem:[%s1 + $0x10] sm:$0xff]
      %v252 = vld [vmem:[%s1 + $0x18] sm:$0xff]
      %v253 = vld [vmem:[%s1 + $0x20] sm:$0xff]
      %v254 = vld [vmem:[%s1 + $0x28] sm:$0xff]
      %v255 = vld [vmem:[%s1 + $0x30] sm:$0xff]
      %v256 = vld [vmem:[%s1 + $0x38] sm:$0xff]
      %v257 = vld [vmem:[%s1 + $0x40] sm:$0xff]
      %v258 = vld [vmem:[%s1 + $0x48] sm:$0xff]
      %v259 = vld [vmem:[%s1 + $0x50] sm:$0xff]
      %v260 = vld [vmem:[%s1 + $0x58] sm:$0xff]
      %v261 = vld [vmem:[%s1 + $0x60] sm:$0xff]
      %v262 = vld [vmem:[%s1 + $0x68] sm:$0xff]
      %v263 = vld [vmem:[%s1 + $0x70] sm:$0xff]
      %v264 = vld [vmem:[%s1 + $0x78] sm:$0xff]
      %v265 = vld [vmem:[%s1 + $0x80] sm:$0xff]
      %v266 = vld [vmem:[%s1 + $0x88] sm:$0xff]
      %v267 = vld [vmem:[%s1 + $0x90] sm:$0xff]
      %v268 = vld [vmem:[%s1 + $0x98] sm:$0xff]
      %v269 = vld [vmem:[%s1 + $0xa0] sm:$0xff]
      %v270 = vld [vmem:[%s1 + $0xa8] sm:$0xff]
      %v271 = vld [vmem:[%s1 + $0xb0] sm:$0xff]
      %v272 = vld [vmem:[%s1 + $0xb8] sm:$0xff]
      %v273 = vld [vmem:[%s1 + $0xc0] sm:$0xff]
      %v274 = vld [vmem:[%s1 + $0xc8] sm:$0xff]
      %v275 = vld [vmem:[%s1 + $0xd0] sm:$0xff]
      %v276 = vld [vmem:[%s1 + $0xd8] sm:$0xff]
      %v277 = vld [vmem:[%s1 + $0xe0] sm:$0xff]
      %v278 = vld [vmem:[%s1 + $0xe8] sm:$0xff]
      %v279 = vld [vmem:[%s1 + $0xf0] sm:$0xff]
      %v280 = vld [vmem:[%s1 + $0xf8] sm:$0xff]
      %v281 = vld [vmem:[%s1 + $0x100] sm:$0xff]
      %v282 = vld [vmem:[%s1 + $0x108] sm:$0xff]
      %v283 = vld [vmem:[%s1 + $0x110] sm:$0xff]
      %v284 = vld [vmem:[%s1 + $0x118] sm:$0xff]
      %v285 = vld [vmem:[%s236 + $0x1] sm:$0xff]
      %v286 = vld [vmem:[%s236 + $0x9] sm:$0xff]
      %s287 = scalar_lea.vmem %s1, 288
      %v288 = vld [vmem:[%s287] sm:$0xff]
      %v289 = vld [vmem:[%s287 + $0x8] sm:$0xff]
      %v290 = vld [vmem:[%s287 + $0x10] sm:$0xff]
      %v291 = vld [vmem:[%s287 + $0x18] sm:$0xff]
      %v292 = vld [vmem:[%s287 + $0x20] sm:$0xff]
      %v293 = vld [vmem:[%s287 + $0x28] sm:$0xff]
      %v294 = vld [vmem:[%s287 + $0x30] sm:$0xff]
      %v295 = vld [vmem:[%s287 + $0x38] sm:$0xff]
      %v296 = vld [vmem:[%s287 + $0x40] sm:$0xff]
      %v297 = vld [vmem:[%s287 + $0x48] sm:$0xff]
      %v298 = vld [vmem:[%s287 + $0x50] sm:$0xff]
      %v299 = vld [vmem:[%s287 + $0x58] sm:$0xff]
      %v300 = vld [vmem:[%s287 + $0x60] sm:$0xff]
      %v301 = vld [vmem:[%s287 + $0x68] sm:$0xff]
      %v302 = vld [vmem:[%s287 + $0x70] sm:$0xff]
      %v303 = vld [vmem:[%s287 + $0x78] sm:$0xff]
      %v304 = vld [vmem:[%s287 + $0x80] sm:$0xff]
      %v305 = vld [vmem:[%s287 + $0x88] sm:$0xff]
      %v306 = vld [vmem:[%s287 + $0x90] sm:$0xff]
      %v307 = vld [vmem:[%s287 + $0x98] sm:$0xff]
      %v308 = vld [vmem:[%s287 + $0xa0] sm:$0xff]
      %v309 = vld [vmem:[%s287 + $0xa8] sm:$0xff]
      %v310 = vld [vmem:[%s287 + $0xb0] sm:$0xff]
      %v311 = vld [vmem:[%s287 + $0xb8] sm:$0xff]
      %v312 = vld [vmem:[%s287 + $0xc0] sm:$0xff]
      %v313 = vld [vmem:[%s287 + $0xc8] sm:$0xff]
      %v314 = vld [vmem:[%s287 + $0xd0] sm:$0xff]
      %v315 = vld [vmem:[%s287 + $0xd8] sm:$0xff]
      %v316 = vld [vmem:[%s287 + $0xe0] sm:$0xff]
      %v317 = vld [vmem:[%s287 + $0xe8] sm:$0xff]
      %v318 = vld [vmem:[%s287 + $0xf0] sm:$0xff]
      %v319 = vld [vmem:[%s287 + $0xf8] sm:$0xff]
      %v320 = vld [vmem:[%s287 + $0x100] sm:$0xff]
      %v321 = vld [vmem:[%s287 + $0x108] sm:$0xff]
      %v322 = vld [vmem:[%s287 + $0x110] sm:$0xff]
      %v323 = vld [vmem:[%s287 + $0x118] sm:$0xff]
      %vm324 = vcmask 588800
      %v326 = vsel %vm324, %v285, 0
      %v329 = vsel %vm324, %v286, 0
      %331 = vmatpush.msra.mxu0 0.0
      %332 = vmatpush.msra.mxu0 0.0
      %333 = vmatpush.msra.mxu0 0.0
      %334 = vmatpush.msra.mxu0 0.0
      %335 = vmatpush.msra.mxu0 0.0
      %336 = vmatpush.msra.mxu0 0.0
      %337 = vmatpush.msra.mxu0 0.0
      %338 = vmatpush.msra.mxu0 %v320
      %339 = vmatpush.msra.mxu0 %v316
      %340 = vmatpush.msra.mxu0 %v312
      %341 = vmatpush.msra.mxu0 %v308
      %342 = vmatpush.msra.mxu0 %v304
      %343 = vmatpush.msra.mxu0 %v300
      %344 = vmatpush.msra.mxu0 %v296
      %345 = vmatpush.msra.mxu0 %v292
      %346 = vmatpush.msra.mxu0 %v288
      %347 = vmatmul.f32.gmra.mxu0 %v326
      %v348 = vpop.f32.mrf.mxu0
      %v349 = vadd.f32 0.0, %v348
      %350 = vmatmul.f32.gmra.mxu0 %v329
      %v351 = vpop.f32.mrf.mxu0
      %v352 = vadd.f32 0.0, %v351
      %353 = vdwg.mxu0
      %354 = vmatpush.msra.mxu0 0.0
      %355 = vmatpush.msra.mxu0 0.0
      %356 = vmatpush.msra.mxu0 0.0
      %357 = vmatpush.msra.mxu0 0.0
      %358 = vmatpush.msra.mxu0 0.0
      %359 = vmatpush.msra.mxu0 0.0
      %360 = vmatpush.msra.mxu0 0.0
      %361 = vmatpush.msra.mxu0 %v321
      %362 = vmatpush.msra.mxu0 %v317
      %363 = vmatpush.msra.mxu0 %v313
      %364 = vmatpush.msra.mxu0 %v309
      %365 = vmatpush.msra.mxu0 %v305
      %366 = vmatpush.msra.mxu0 %v301
      %367 = vmatpush.msra.mxu0 %v297
      %368 = vmatpush.msra.mxu0 %v293
      %369 = vmatpush.msra.mxu0 %v289
      %370 = vmatmul.f32.gmra.mxu0 %v326
      %v371 = vpop.f32.mrf.mxu0
      %v372 = vadd.f32 0.0, %v371
      %373 = vmatmul.f32.gmra.mxu0 %v329
      %v374 = vpop.f32.mrf.mxu0
      %v375 = vadd.f32 0.0, %v374
      %376 = vdwg.mxu0
      %377 = vmatpush.msra.mxu0 0.0
      %378 = vmatpush.msra.mxu0 0.0
      %379 = vmatpush.msra.mxu0 0.0
      %380 = vmatpush.msra.mxu0 0.0
      %381 = vmatpush.msra.mxu0 0.0
      %382 = vmatpush.msra.mxu0 0.0
      %383 = vmatpush.msra.mxu0 0.0
      %384 = vmatpush.msra.mxu0 %v322
      %385 = vmatpush.msra.mxu0 %v318
      %386 = vmatpush.msra.mxu0 %v314
      %387 = vmatpush.msra.mxu0 %v310
      %388 = vmatpush.msra.mxu0 %v306
      %389 = vmatpush.msra.mxu0 %v302
      %390 = vmatpush.msra.mxu0 %v298
      %391 = vmatpush.msra.mxu0 %v294
      %392 = vmatpush.msra.mxu0 %v290
      %393 = vmatmul.f32.gmra.mxu0 %v326
      %v394 = vpop.f32.mrf.mxu0
      %v395 = vadd.f32 0.0, %v394
      %396 = vmatmul.f32.gmra.mxu0 %v329
      %v397 = vpop.f32.mrf.mxu0
      %v398 = vadd.f32 0.0, %v397
      %399 = vdwg.mxu0
      %400 = vmatpush.msra.mxu0 0.0
      %401 = vmatpush.msra.mxu0 0.0
      %402 = vmatpush.msra.mxu0 0.0
      %403 = vmatpush.msra.mxu0 0.0
      %404 = vmatpush.msra.mxu0 0.0
      %405 = vmatpush.msra.mxu0 0.0
      %406 = vmatpush.msra.mxu0 0.0
      %407 = vmatpush.msra.mxu0 %v323
      %408 = vmatpush.msra.mxu0 %v319
      %409 = vmatpush.msra.mxu0 %v315
      %410 = vmatpush.msra.mxu0 %v311
      %411 = vmatpush.msra.mxu0 %v307
      %412 = vmatpush.msra.mxu0 %v303
      %413 = vmatpush.msra.mxu0 %v299
      %414 = vmatpush.msra.mxu0 %v295
      %415 = vmatpush.msra.mxu0 %v291
      %416 = vmatmul.f32.gmra.mxu0 %v326
      %v417 = vpop.f32.mrf.mxu0
      %v418 = vadd.f32 0.0, %v417
      %419 = vmatmul.f32.gmra.mxu0 %v329
      %v420 = vpop.f32.mrf.mxu0
      %v421 = vadd.f32 0.0, %v420
      %422 = vdwg.mxu0
      %v424 = vsel %vm324, %v247, 0
      %v427 = vsel %vm324, %v248, 0
      %429 = vmatpush.msra.mxu0 0.0
      %430 = vmatpush.msra.mxu0 0.0
      %431 = vmatpush.msra.mxu0 0.0
      %432 = vmatpush.msra.mxu0 0.0
      %433 = vmatpush.msra.mxu0 0.0
      %434 = vmatpush.msra.mxu0 0.0
      %435 = vmatpush.msra.mxu0 0.0
      %436 = vmatpush.msra.mxu0 %v281
      %437 = vmatpush.msra.mxu0 %v277
      %438 = vmatpush.msra.mxu0 %v273
      %439 = vmatpush.msra.mxu0 %v269
      %440 = vmatpush.msra.mxu0 %v265
      %441 = vmatpush.msra.mxu0 %v261
      %442 = vmatpush.msra.mxu0 %v257
      %443 = vmatpush.msra.mxu0 %v253
      %444 = vmatpush.msra.mxu0 %v249
      %445 = vmatmul.f32.gmra.mxu0 %v424
      %v446 = vpop.f32.mrf.mxu0
      %v447 = vadd.f32 %v349, %v446
      %448 = vmatmul.f32.gmra.mxu0 %v427
      %v449 = vpop.f32.mrf.mxu0
      %v450 = vadd.f32 %v352, %v449
      %451 = vdwg.mxu0
      %452 = vmatpush.msra.mxu0 0.0
      %453 = vmatpush.msra.mxu0 0.0
      %454 = vmatpush.msra.mxu0 0.0
      %455 = vmatpush.msra.mxu0 0.0
      %456 = vmatpush.msra.mxu0 0.0
      %457 = vmatpush.msra.mxu0 0.0
      %458 = vmatpush.msra.mxu0 0.0
      %459 = vmatpush.msra.mxu0 %v282
      %460 = vmatpush.msra.mxu0 %v278
      %461 = vmatpush.msra.mxu0 %v274
      %462 = vmatpush.msra.mxu0 %v270
      %463 = vmatpush.msra.mxu0 %v266
      %464 = vmatpush.msra.mxu0 %v262
      %465 = vmatpush.msra.mxu0 %v258
      %466 = vmatpush.msra.mxu0 %v254
      %467 = vmatpush.msra.mxu0 %v250
      %468 = vmatmul.f32.gmra.mxu0 %v424
      %v469 = vpop.f32.mrf.mxu0
      %v470 = vadd.f32 %v372, %v469
      %471 = vmatmul.f32.gmra.mxu0 %v427
      %v472 = vpop.f32.mrf.mxu0
      %v473 = vadd.f32 %v375, %v472
      %474 = vdwg.mxu0
      %475 = vmatpush.msra.mxu0 0.0
      %476 = vmatpush.msra.mxu0 0.0
      %477 = vmatpush.msra.mxu0 0.0
      %478 = vmatpush.msra.mxu0 0.0
      %479 = vmatpush.msra.mxu0 0.0
      %480 = vmatpush.msra.mxu0 0.0
      %481 = vmatpush.msra.mxu0 0.0
      %482 = vmatpush.msra.mxu0 %v283
      %483 = vmatpush.msra.mxu0 %v279
      %484 = vmatpush.msra.mxu0 %v275
      %485 = vmatpush.msra.mxu0 %v271
      %486 = vmatpush.msra.mxu0 %v267
      %487 = vmatpush.msra.mxu0 %v263
      %488 = vmatpush.msra.mxu0 %v259
      %489 = vmatpush.msra.mxu0 %v255
      %490 = vmatpush.msra.mxu0 %v251
      %491 = vmatmul.f32.gmra.mxu0 %v424
      %v492 = vpop.f32.mrf.mxu0
      %v493 = vadd.f32 %v395, %v492
      %494 = vmatmul.f32.gmra.mxu0 %v427
      %v495 = vpop.f32.mrf.mxu0
      %v496 = vadd.f32 %v398, %v495
      %497 = vdwg.mxu0
      %498 = vmatpush.msra.mxu0 0.0
      %499 = vmatpush.msra.mxu0 0.0
      %500 = vmatpush.msra.mxu0 0.0
      %501 = vmatpush.msra.mxu0 0.0
      %502 = vmatpush.msra.mxu0 0.0
      %503 = vmatpush.msra.mxu0 0.0
      %504 = vmatpush.msra.mxu0 0.0
      %505 = vmatpush.msra.mxu0 %v284
      %506 = vmatpush.msra.mxu0 %v280
      %507 = vmatpush.msra.mxu0 %v276
      %508 = vmatpush.msra.mxu0 %v272
      %509 = vmatpush.msra.mxu0 %v268
      %510 = vmatpush.msra.mxu0 %v264
      %511 = vmatpush.msra.mxu0 %v260
      %512 = vmatpush.msra.mxu0 %v256
      %513 = vmatpush.msra.mxu0 %v252
      %514 = vmatmul.f32.gmra.mxu0 %v424
      %v515 = vpop.f32.mrf.mxu0
      %v516 = vadd.f32 %v418, %v515
      %517 = vmatmul.f32.gmra.mxu0 %v427
      %v518 = vpop.f32.mrf.mxu0
      %v519 = vadd.f32 %v421, %v518
      %520 = vdwg.mxu0
      %v521 = vld [vmem:[%s236 + $0x2] sm:$0xff]
      %v522 = vld [vmem:[%s236 + $0xa] sm:$0xff]
      %s523 = scalar_lea.vmem %s1, 576
      %v524 = vld [vmem:[%s523] sm:$0xff]
      %v525 = vld [vmem:[%s523 + $0x8] sm:$0xff]
      %v526 = vld [vmem:[%s523 + $0x10] sm:$0xff]
      %v527 = vld [vmem:[%s523 + $0x18] sm:$0xff]
      %v528 = vld [vmem:[%s523 + $0x20] sm:$0xff]
      %v529 = vld [vmem:[%s523 + $0x28] sm:$0xff]
      %v530 = vld [vmem:[%s523 + $0x30] sm:$0xff]
      %v531 = vld [vmem:[%s523 + $0x38] sm:$0xff]
      %v532 = vld [vmem:[%s523 + $0x40] sm:$0xff]
      %v533 = vld [vmem:[%s523 + $0x48] sm:$0xff]
      %v534 = vld [vmem:[%s523 + $0x50] sm:$0xff]
      %v535 = vld [vmem:[%s523 + $0x58] sm:$0xff]
      %v536 = vld [vmem:[%s523 + $0x60] sm:$0xff]
      %v537 = vld [vmem:[%s523 + $0x68] sm:$0xff]
      %v538 = vld [vmem:[%s523 + $0x70] sm:$0xff]
      %v539 = vld [vmem:[%s523 + $0x78] sm:$0xff]
      %v540 = vld [vmem:[%s523 + $0x80] sm:$0xff]
      %v541 = vld [vmem:[%s523 + $0x88] sm:$0xff]
      %v542 = vld [vmem:[%s523 + $0x90] sm:$0xff]
      %v543 = vld [vmem:[%s523 + $0x98] sm:$0xff]
      %v544 = vld [vmem:[%s523 + $0xa0] sm:$0xff]
      %v545 = vld [vmem:[%s523 + $0xa8] sm:$0xff]
      %v546 = vld [vmem:[%s523 + $0xb0] sm:$0xff]
      %v547 = vld [vmem:[%s523 + $0xb8] sm:$0xff]
      %v548 = vld [vmem:[%s523 + $0xc0] sm:$0xff]
      %v549 = vld [vmem:[%s523 + $0xc8] sm:$0xff]
      %v550 = vld [vmem:[%s523 + $0xd0] sm:$0xff]
      %v551 = vld [vmem:[%s523 + $0xd8] sm:$0xff]
      %v552 = vld [vmem:[%s523 + $0xe0] sm:$0xff]
      %v553 = vld [vmem:[%s523 + $0xe8] sm:$0xff]
      %v554 = vld [vmem:[%s523 + $0xf0] sm:$0xff]
      %v555 = vld [vmem:[%s523 + $0xf8] sm:$0xff]
      %v556 = vld [vmem:[%s523 + $0x100] sm:$0xff]
      %v557 = vld [vmem:[%s523 + $0x108] sm:$0xff]
      %v558 = vld [vmem:[%s523 + $0x110] sm:$0xff]
      %v559 = vld [vmem:[%s523 + $0x118] sm:$0xff]
      %v561 = vsel %vm324, %v521, 0
      %v564 = vsel %vm324, %v522, 0
      %566 = vmatpush.msra.mxu0 0.0
      %567 = vmatpush.msra.mxu0 0.0
      %568 = vmatpush.msra.mxu0 0.0
      %569 = vmatpush.msra.mxu0 0.0
      %570 = vmatpush.msra.mxu0 0.0
      %571 = vmatpush.msra.mxu0 0.0
      %572 = vmatpush.msra.mxu0 0.0
      %573 = vmatpush.msra.mxu0 %v556
      %574 = vmatpush.msra.mxu0 %v552
      %575 = vmatpush.msra.mxu0 %v548
      %576 = vmatpush.msra.mxu0 %v544
      %577 = vmatpush.msra.mxu0 %v540
      %578 = vmatpush.msra.mxu0 %v536
      %579 = vmatpush.msra.mxu0 %v532
      %580 = vmatpush.msra.mxu0 %v528
      %581 = vmatpush.msra.mxu0 %v524
      %582 = vmatmul.f32.gmra.mxu0 %v561
      %v583 = vpop.f32.mrf.mxu0
      %v584 = vadd.f32 0.0, %v583
      %585 = vmatmul.f32.gmra.mxu0 %v564
      %v586 = vpop.f32.mrf.mxu0
      %v587 = vadd.f32 0.0, %v586
      %588 = vdwg.mxu0
      %589 = vmatpush.msra.mxu0 0.0
      %590 = vmatpush.msra.mxu0 0.0
      %591 = vmatpush.msra.mxu0 0.0
      %592 = vmatpush.msra.mxu0 0.0
      %593 = vmatpush.msra.mxu0 0.0
      %594 = vmatpush.msra.mxu0 0.0
      %595 = vmatpush.msra.mxu0 0.0
      %596 = vmatpush.msra.mxu0 %v557
      %597 = vmatpush.msra.mxu0 %v553
      %598 = vmatpush.msra.mxu0 %v549
      %599 = vmatpush.msra.mxu0 %v545
      %600 = vmatpush.msra.mxu0 %v541
      %601 = vmatpush.msra.mxu0 %v537
      %602 = vmatpush.msra.mxu0 %v533
      %603 = vmatpush.msra.mxu0 %v529
      %604 = vmatpush.msra.mxu0 %v525
      %605 = vmatmul.f32.gmra.mxu0 %v561
      %v606 = vpop.f32.mrf.mxu0
      %v607 = vadd.f32 0.0, %v606
      %608 = vmatmul.f32.gmra.mxu0 %v564
      %v609 = vpop.f32.mrf.mxu0
      %v610 = vadd.f32 0.0, %v609
      %611 = vdwg.mxu0
      %612 = vmatpush.msra.mxu0 0.0
      %613 = vmatpush.msra.mxu0 0.0
      %614 = vmatpush.msra.mxu0 0.0
      %615 = vmatpush.msra.mxu0 0.0
      %616 = vmatpush.msra.mxu0 0.0
      %617 = vmatpush.msra.mxu0 0.0
      %618 = vmatpush.msra.mxu0 0.0
      %619 = vmatpush.msra.mxu0 %v558
      %620 = vmatpush.msra.mxu0 %v554
      %621 = vmatpush.msra.mxu0 %v550
      %622 = vmatpush.msra.mxu0 %v546
      %623 = vmatpush.msra.mxu0 %v542
      %624 = vmatpush.msra.mxu0 %v538
      %625 = vmatpush.msra.mxu0 %v534
      %626 = vmatpush.msra.mxu0 %v530
      %627 = vmatpush.msra.mxu0 %v526
      %628 = vmatmul.f32.gmra.mxu0 %v561
      %v629 = vpop.f32.mrf.mxu0
      %v630 = vadd.f32 0.0, %v629
      %631 = vmatmul.f32.gmra.mxu0 %v564
      %v632 = vpop.f32.mrf.mxu0
      %v633 = vadd.f32 0.0, %v632
      %634 = vdwg.mxu0
      %635 = vmatpush.msra.mxu0 0.0
      %636 = vmatpush.msra.mxu0 0.0
      %637 = vmatpush.msra.mxu0 0.0
      %638 = vmatpush.msra.mxu0 0.0
      %639 = vmatpush.msra.mxu0 0.0
      %640 = vmatpush.msra.mxu0 0.0
      %641 = vmatpush.msra.mxu0 0.0
      %642 = vmatpush.msra.mxu0 %v559
      %643 = vmatpush.msra.mxu0 %v555
      %644 = vmatpush.msra.mxu0 %v551
      %645 = vmatpush.msra.mxu0 %v547
      %646 = vmatpush.msra.mxu0 %v543
      %647 = vmatpush.msra.mxu0 %v539
      %648 = vmatpush.msra.mxu0 %v535
      %649 = vmatpush.msra.mxu0 %v531
      %650 = vmatpush.msra.mxu0 %v527
      %651 = vmatmul.f32.gmra.mxu0 %v561
      %v652 = vpop.f32.mrf.mxu0
      %v653 = vadd.f32 0.0, %v652
      %654 = vmatmul.f32.gmra.mxu0 %v564
      %v655 = vpop.f32.mrf.mxu0
      %v656 = vadd.f32 0.0, %v655
      %657 = vdwg.mxu0
      %v658 = vadd.f32 %v447, %v584
      %v659 = vadd.f32 %v470, %v607
      %v660 = vadd.f32 %v493, %v630
      %v661 = vadd.f32 %v516, %v653
      %v662 = vadd.f32 %v450, %v587
      %v663 = vadd.f32 %v473, %v610
      %v664 = vadd.f32 %v496, %v633
      %v665 = vadd.f32 %v519, %v656
      %s666 = smul.u32 %s17, 8
      %s667 = smul.addr %s666, 8
      %s668 = scalar_lea.vmem %s6, %s667
      %669 = vst [vmem:[%s668] sm:$0xff] %v658
      %670 = vst [vmem:[%s668 + $0x8] sm:$0xff] %v659
      %671 = vst [vmem:[%s668 + $0x10] sm:$0xff] %v660
      %672 = vst [vmem:[%s668 + $0x18] sm:$0xff] %v661
      %673 = vst [vmem:[%s668 + $0x20] sm:$0xff] %v662
      %674 = vst [vmem:[%s668 + $0x28] sm:$0xff] %v663
      %675 = vst [vmem:[%s668 + $0x30] sm:$0xff] %v664
      %676 = vst [vmem:[%s668 + $0x38] sm:$0xff] %v665
      %v677 = vld [vmem:[#allocation2] sm:$0xf]
      %v678 = vadd.f32 %v658, %v662
      %v679 = vrot.slane %v678, 4
      %v680 = vadd.f32 %v678, %v679
      %v681 = vrot.slane %v680, 2
      %v682 = vadd.f32 %v680, %v681
      %v683 = vrot.slane %v682, 1
      %v684 = vadd.f32 %v682, %v683
      %v685 = vadd.f32 %v659, %v663
      %v686 = vrot.slane %v685, 4
      %v687 = vadd.f32 %v685, %v686
      %v688 = vrot.slane %v687, 2
      %v689 = vadd.f32 %v687, %v688
      %v690 = vrot.slane %v689, 1
      %v691 = vadd.f32 %v689, %v690
      %v692 = vadd.f32 %v660, %v664
      %v693 = vrot.slane %v692, 4
      %v694 = vadd.f32 %v692, %v693
      %v695 = vrot.slane %v694, 2
      %v696 = vadd.f32 %v694, %v695
      %v697 = vrot.slane %v696, 1
      %v698 = vadd.f32 %v696, %v697
      %v699 = vadd.f32 %v661, %v665
      %v700 = vrot.slane %v699, 4
      %v701 = vadd.f32 %v699, %v700
      %v702 = vrot.slane %v701, 2
      %v703 = vadd.f32 %v701, %v702
      %v704 = vrot.slane %v703, 1
      %v705 = vadd.f32 %v703, %v704
      %v710 = vrot.slane %v691, 7
      %v711 = vrot.slane %v698, 6
      %v712 = vrot.slane %v705, 5
      %vm713 = vcmask 1040384
      %v714 = vsel %vm713, %v684, %v710
      %vm715 = vcmask 1042434
      %v716 = vsel %vm715, %v711, %v712
      %vm717 = vcmask 1041408
      %v718 = vsel %vm717, %v714, %v716
      %v720 = vadd.f32 %v677, %v718
      %v721 = vlaneseq
      %vm722 = vcmp.ge.s32.totalorder %v721, 0
      %vm723 = vcmp.lt.s32.totalorder %v721, 512
      %vm724 = vmand %vm722, %vm723
      %725 = vst.msk [vmem:[#allocation2] sm:$0xf] %vm724, %v720
      %v726 = vld [vmem:[#allocation3] sm:$0xf]
      %v727 = vmul.f32 %v658, %v658
      %v728 = vmul.f32 %v659, %v659
      %v729 = vmul.f32 %v660, %v660
      %v730 = vmul.f32 %v661, %v661
      %v731 = vmul.f32 %v662, %v662
      %v732 = vmul.f32 %v663, %v663
      %v733 = vmul.f32 %v664, %v664
      %v734 = vmul.f32 %v665, %v665
      %v735 = vadd.f32 %v727, %v731
      %v736 = vrot.slane %v735, 4
      %v737 = vadd.f32 %v735, %v736
      %v738 = vrot.slane %v737, 2
      %v739 = vadd.f32 %v737, %v738
      %v740 = vrot.slane %v739, 1
      %v741 = vadd.f32 %v739, %v740
      %v742 = vadd.f32 %v728, %v732
      %v743 = vrot.slane %v742, 4
      %v744 = vadd.f32 %v742, %v743
      %v745 = vrot.slane %v744, 2
      %v746 = vadd.f32 %v744, %v745
      %v747 = vrot.slane %v746, 1
      %v748 = vadd.f32 %v746, %v747
      %v749 = vadd.f32 %v729, %v733
      %v750 = vrot.slane %v749, 4
      %v751 = vadd.f32 %v749, %v750
      %v752 = vrot.slane %v751, 2
      %v753 = vadd.f32 %v751, %v752
      %v754 = vrot.slane %v753, 1
      %v755 = vadd.f32 %v753, %v754
      %v756 = vadd.f32 %v730, %v734
      %v757 = vrot.slane %v756, 4
      %v758 = vadd.f32 %v756, %v757
      %v759 = vrot.slane %v758, 2
      %v760 = vadd.f32 %v758, %v759
      %v761 = vrot.slane %v760, 1
      %v762 = vadd.f32 %v760, %v761
      %v767 = vrot.slane %v748, 7
      %v768 = vrot.slane %v755, 6
      %v769 = vrot.slane %v762, 5
      %v770 = vsel %vm713, %v741, %v767
      %v771 = vsel %vm715, %v768, %v769
      %v772 = vsel %vm717, %v770, %v771
      %v774 = vadd.f32 %v726, %v772
      %775 = vst.msk [vmem:[#allocation3] sm:$0xf] %vm724, %v774
      %p776 = scmp.eq.s32.totalorder %s17, 1
      // Predicated region
      $region49: #{up_conv_forward.1} parent=43 // pred_check
        %p777 = pneg %p776
      $region50: #{up_conv_forward.1} parent=43 // pred_check_branch
        %779 = sbr.rel (%p777) target = $region52
      $region51: #{up_conv_forward.1} parent=43 // pred_region
        %v780 = vld [vmem:[#allocation2] sm:$0xf]
        %v781 = vld [vmem:[%s2] sm:$0xff]
        %v782 = vld [vmem:[%s2 + $0x8] sm:$0xff]
        %v783 = vld [vmem:[%s2 + $0x10] sm:$0xff]
        %v784 = vld [vmem:[%s2 + $0x18] sm:$0xff]
        %v785 = vld [vmem:[%s2 + $0x20] sm:$0xff]
        %v786 = vld [vmem:[%s2 + $0x28] sm:$0xff]
        %v787 = vld [vmem:[%s2 + $0x30] sm:$0xff]
        %v788 = vld [vmem:[%s2 + $0x38] sm:$0xff]
        %v789 = vld [vmem:[%s2 + $0x40] sm:$0xff]
        %v790 = vld [vmem:[%s2 + $0x48] sm:$0xff]
        %v791 = vld [vmem:[%s2 + $0x50] sm:$0xff]
        %v792 = vld [vmem:[%s2 + $0x58] sm:$0xff]
        %v793 = vld [vmem:[%s2 + $0x60] sm:$0xff]
        %v794 = vld [vmem:[%s2 + $0x68] sm:$0xff]
        %v795 = vld [vmem:[%s2 + $0x70] sm:$0xff]
        %v796 = vld [vmem:[%s2 + $0x78] sm:$0xff]
        %v797 = vld [vmem:[%s2 + $0x80] sm:$0xff]
        %v798 = vld [vmem:[%s2 + $0x88] sm:$0xff]
        %v799 = vld [vmem:[%s2 + $0x90] sm:$0xff]
        %v800 = vld [vmem:[%s2 + $0x98] sm:$0xff]
        %v801 = vld [vmem:[%s2 + $0xa0] sm:$0xff]
        %v802 = vld [vmem:[%s2 + $0xa8] sm:$0xff]
        %v803 = vld [vmem:[%s2 + $0xb0] sm:$0xff]
        %v804 = vld [vmem:[%s2 + $0xb8] sm:$0xff]
        %v805 = vld [vmem:[%s2 + $0xc0] sm:$0xff]
        %v806 = vld [vmem:[%s2 + $0xc8] sm:$0xff]
        %v807 = vld [vmem:[%s2 + $0xd0] sm:$0xff]
        %v808 = vld [vmem:[%s2 + $0xd8] sm:$0xff]
        %v809 = vld [vmem:[%s2 + $0xe0] sm:$0xff]
        %v810 = vld [vmem:[%s2 + $0xe8] sm:$0xff]
        %v811 = vld [vmem:[%s2 + $0xf0] sm:$0xff]
        %v812 = vld [vmem:[%s2 + $0xf8] sm:$0xff]
        %v813 = vld [vmem:[%s2 + $0x100] sm:$0xff]
        %v814 = vld [vmem:[%s2 + $0x108] sm:$0xff]
        %v815 = vld [vmem:[%s2 + $0x110] sm:$0xff]
        %v816 = vld [vmem:[%s2 + $0x118] sm:$0xff]
        %v817 = vld [vmem:[%s2 + $0x120] sm:$0xff]
        %v818 = vld [vmem:[%s2 + $0x128] sm:$0xff]
        %v819 = vld [vmem:[%s2 + $0x130] sm:$0xff]
        %v820 = vld [vmem:[%s2 + $0x138] sm:$0xff]
        %v821 = vld [vmem:[%s2 + $0x140] sm:$0xff]
        %v822 = vld [vmem:[%s2 + $0x148] sm:$0xff]
        %v823 = vld [vmem:[%s2 + $0x150] sm:$0xff]
        %v824 = vld [vmem:[%s2 + $0x158] sm:$0xff]
        %v825 = vld [vmem:[%s2 + $0x160] sm:$0xff]
        %v826 = vld [vmem:[%s2 + $0x168] sm:$0xff]
        %v827 = vld [vmem:[%s2 + $0x170] sm:$0xff]
        %v828 = vld [vmem:[%s2 + $0x178] sm:$0xff]
        %v829 = vld [vmem:[%s2 + $0x180] sm:$0xff]
        %v830 = vld [vmem:[%s2 + $0x188] sm:$0xff]
        %v831 = vld [vmem:[%s2 + $0x190] sm:$0xff]
        %v832 = vld [vmem:[%s2 + $0x198] sm:$0xff]
        %v833 = vld [vmem:[%s2 + $0x1a0] sm:$0xff]
        %v834 = vld [vmem:[%s2 + $0x1a8] sm:$0xff]
        %v835 = vld [vmem:[%s2 + $0x1b0] sm:$0xff]
        %v836 = vld [vmem:[%s2 + $0x1b8] sm:$0xff]
        %v837 = vld [vmem:[%s2 + $0x1c0] sm:$0xff]
        %v838 = vld [vmem:[%s2 + $0x1c8] sm:$0xff]
        %v839 = vld [vmem:[%s2 + $0x1d0] sm:$0xff]
        %v840 = vld [vmem:[%s2 + $0x1d8] sm:$0xff]
        %v841 = vld [vmem:[%s2 + $0x1e0] sm:$0xff]
        %v842 = vld [vmem:[%s2 + $0x1e8] sm:$0xff]
        %v843 = vld [vmem:[%s2 + $0x1f0] sm:$0xff]
        %v844 = vld [vmem:[%s2 + $0x1f8] sm:$0xff]
        %v846 = vperm.slane %v780, 0
        %v847 = vperm.slane %v780, 1
        %v848 = vperm.slane %v780, 2
        %v849 = vperm.slane %v780, 3
        %854 = vmatpush.msra.mxu0 %v796
        %855 = vmatpush.msra.mxu0 %v795
        %856 = vmatpush.msra.mxu0 %v794
        %857 = vmatpush.msra.mxu0 %v793
        %858 = vmatpush.msra.mxu0 %v792
        %859 = vmatpush.msra.mxu0 %v791
        %860 = vmatpush.msra.mxu0 %v790
        %861 = vmatpush.msra.mxu0 %v789
        %862 = vmatpush.msra.mxu0 %v788
        %863 = vmatpush.msra.mxu0 %v787
        %864 = vmatpush.msra.mxu0 %v786
        %865 = vmatpush.msra.mxu0 %v785
        %866 = vmatpush.msra.mxu0 %v784
        %867 = vmatpush.msra.mxu0 %v783
        %868 = vmatpush.msra.mxu0 %v782
        %869 = vmatpush.msra.mxu0 %v781
        %870 = vmatmul.f32.gmra.mxu0 %v846
        %v871 = vpop.f32.mrf.mxu0
        %v872 = vadd.f32 0.0, %v871
        %873 = vdwg.mxu0
        %874 = vmatpush.msra.mxu0 %v812
        %875 = vmatpush.msra.mxu0 %v811
        %876 = vmatpush.msra.mxu0 %v810
        %877 = vmatpush.msra.mxu0 %v809
        %878 = vmatpush.msra.mxu0 %v808
        %879 = vmatpush.msra.mxu0 %v807
        %880 = vmatpush.msra.mxu0 %v806
        %881 = vmatpush.msra.mxu0 %v805
        %882 = vmatpush.msra.mxu0 %v804
        %883 = vmatpush.msra.mxu0 %v803
        %884 = vmatpush.msra.mxu0 %v802
        %885 = vmatpush.msra.mxu0 %v801
        %886 = vmatpush.msra.mxu0 %v800
        %887 = vmatpush.msra.mxu0 %v799
        %888 = vmatpush.msra.mxu0 %v798
        %889 = vmatpush.msra.mxu0 %v797
        %890 = vmatmul.f32.gmra.mxu0 %v847
        %v891 = vpop.f32.mrf.mxu0
        %v892 = vadd.f32 %v872, %v891
        %893 = vdwg.mxu0
        %894 = vmatpush.msra.mxu0 %v828
        %895 = vmatpush.msra.mxu0 %v827
        %896 = vmatpush.msra.mxu0 %v826
        %897 = vmatpush.msra.mxu0 %v825
        %898 = vmatpush.msra.mxu0 %v824
        %899 = vmatpush.msra.mxu0 %v823
        %900 = vmatpush.msra.mxu0 %v822
        %901 = vmatpush.msra.mxu0 %v821
        %902 = vmatpush.msra.mxu0 %v820
        %903 = vmatpush.msra.mxu0 %v819
        %904 = vmatpush.msra.mxu0 %v818
        %905 = vmatpush.msra.mxu0 %v817
        %906 = vmatpush.msra.mxu0 %v816
        %907 = vmatpush.msra.mxu0 %v815
        %908 = vmatpush.msra.mxu0 %v814
        %909 = vmatpush.msra.mxu0 %v813
        %910 = vmatmul.f32.gmra.mxu0 %v848
        %v911 = vpop.f32.mrf.mxu0
        %v912 = vadd.f32 %v892, %v911
        %913 = vdwg.mxu0
        %914 = vmatpush.msra.mxu0 %v844
        %915 = vmatpush.msra.mxu0 %v843
        %916 = vmatpush.msra.mxu0 %v842
        %917 = vmatpush.msra.mxu0 %v841
        %918 = vmatpush.msra.mxu0 %v840
        %919 = vmatpush.msra.mxu0 %v839
        %920 = vmatpush.msra.mxu0 %v838
        %921 = vmatpush.msra.mxu0 %v837
        %922 = vmatpush.msra.mxu0 %v836
        %923 = vmatpush.msra.mxu0 %v835
        %924 = vmatpush.msra.mxu0 %v834
        %925 = vmatpush.msra.mxu0 %v833
        %926 = vmatpush.msra.mxu0 %v832
        %927 = vmatpush.msra.mxu0 %v831
        %928 = vmatpush.msra.mxu0 %v830
        %929 = vmatpush.msra.mxu0 %v829
        %930 = vmatmul.f32.gmra.mxu0 %v849
        %v931 = vpop.f32.mrf.mxu0
        %v932 = vadd.f32 %v912, %v931
        %933 = vdwg.mxu0
        %v934 = vld [vmem:[#allocation3] sm:$0xf]
        %v936 = vperm.slane %v934, 0
        %v937 = vperm.slane %v934, 1
        %v938 = vperm.slane %v934, 2
        %v939 = vperm.slane %v934, 3
        %944 = vmatpush.msra.mxu0 %v796
        %945 = vmatpush.msra.mxu0 %v795
        %946 = vmatpush.msra.mxu0 %v794
        %947 = vmatpush.msra.mxu0 %v793
        %948 = vmatpush.msra.mxu0 %v792
        %949 = vmatpush.msra.mxu0 %v791
        %950 = vmatpush.msra.mxu0 %v790
        %951 = vmatpush.msra.mxu0 %v789
        %952 = vmatpush.msra.mxu0 %v788
        %953 = vmatpush.msra.mxu0 %v787
        %954 = vmatpush.msra.mxu0 %v786
        %955 = vmatpush.msra.mxu0 %v785
        %956 = vmatpush.msra.mxu0 %v784
        %957 = vmatpush.msra.mxu0 %v783
        %958 = vmatpush.msra.mxu0 %v782
        %959 = vmatpush.msra.mxu0 %v781
        %960 = vmatmul.f32.gmra.mxu0 %v936
        %v961 = vpop.f32.mrf.mxu0
        %v962 = vadd.f32 0.0, %v961
        %963 = vdwg.mxu0
        %964 = vmatpush.msra.mxu0 %v812
        %965 = vmatpush.msra.mxu0 %v811
        %966 = vmatpush.msra.mxu0 %v810
        %967 = vmatpush.msra.mxu0 %v809
        %968 = vmatpush.msra.mxu0 %v808
        %969 = vmatpush.msra.mxu0 %v807
        %970 = vmatpush.msra.mxu0 %v806
        %971 = vmatpush.msra.mxu0 %v805
        %972 = vmatpush.msra.mxu0 %v804
        %973 = vmatpush.msra.mxu0 %v803
        %974 = vmatpush.msra.mxu0 %v802
        %975 = vmatpush.msra.mxu0 %v801
        %976 = vmatpush.msra.mxu0 %v800
        %977 = vmatpush.msra.mxu0 %v799
        %978 = vmatpush.msra.mxu0 %v798
        %979 = vmatpush.msra.mxu0 %v797
        %980 = vmatmul.f32.gmra.mxu0 %v937
        %v981 = vpop.f32.mrf.mxu0
        %v982 = vadd.f32 %v962, %v981
        %983 = vdwg.mxu0
        %984 = vmatpush.msra.mxu0 %v828
        %985 = vmatpush.msra.mxu0 %v827
        %986 = vmatpush.msra.mxu0 %v826
        %987 = vmatpush.msra.mxu0 %v825
        %988 = vmatpush.msra.mxu0 %v824
        %989 = vmatpush.msra.mxu0 %v823
        %990 = vmatpush.msra.mxu0 %v822
        %991 = vmatpush.msra.mxu0 %v821
        %992 = vmatpush.msra.mxu0 %v820
        %993 = vmatpush.msra.mxu0 %v819
        %994 = vmatpush.msra.mxu0 %v818
        %995 = vmatpush.msra.mxu0 %v817
        %996 = vmatpush.msra.mxu0 %v816
        %997 = vmatpush.msra.mxu0 %v815
        %998 = vmatpush.msra.mxu0 %v814
        %999 = vmatpush.msra.mxu0 %v813
        %1000 = vmatmul.f32.gmra.mxu0 %v938
        %v1001 = vpop.f32.mrf.mxu0
        %v1002 = vadd.f32 %v982, %v1001
        %1003 = vdwg.mxu0
        %1004 = vmatpush.msra.mxu0 %v844
        %1005 = vmatpush.msra.mxu0 %v843
        %1006 = vmatpush.msra.mxu0 %v842
        %1007 = vmatpush.msra.mxu0 %v841
        %1008 = vmatpush.msra.mxu0 %v840
        %1009 = vmatpush.msra.mxu0 %v839
        %1010 = vmatpush.msra.mxu0 %v838
        %1011 = vmatpush.msra.mxu0 %v837
        %1012 = vmatpush.msra.mxu0 %v836
        %1013 = vmatpush.msra.mxu0 %v835
        %1014 = vmatpush.msra.mxu0 %v834
        %1015 = vmatpush.msra.mxu0 %v833
        %1016 = vmatpush.msra.mxu0 %v832
        %1017 = vmatpush.msra.mxu0 %v831
        %1018 = vmatpush.msra.mxu0 %v830
        %1019 = vmatpush.msra.mxu0 %v829
        %1020 = vmatmul.f32.gmra.mxu0 %v939
        %v1021 = vpop.f32.mrf.mxu0
        %v1022 = vadd.f32 %v1002, %v1021
        %1023 = vdwg.mxu0
        %v1024 = vmul.f32 %v932, 0.00048828125
        %v1025 = vmul.f32 %v1022, 0.00048828125
        %v1026 = vmul.f32 %v1024, %v1024
        %v1027 = vsub.f32 %v1025, %v1026
        %v1028 = vmax.f32 %v1027, 0.0
        %v1029 = vld [vmem:[%s4] sm:$0x1]
        %v1030 = vadd.f32 %v1028, 1e-05
        %v1031 = vrsqrt.pop %v1030
        %v1032 = vmul.f32 %v1031, %v1030
        %v1033 = vmul.f32 %v1032, %v1031
        %v1034 = vmul.f32 0.5, %v1033
        %v1035 = vsub.f32 1.5, %v1034
        %v1036 = vmul.f32 %v1031, %v1035
        %vm1037 = vweird.f32 %v1030
        %vm1038 = vweird.f32 %v1031
        %vm1039 = vmor %vm1037, %vm1038
        %v1040 = vsel %vm1039, %v1031, %v1036
        %v1041 = vmul.f32 %v1029, %v1040
        %v1042 = vld [vmem:[%s5] sm:$0x1]
        %v1043 = vmul.f32 %v1024, %v1041
        %v1044 = vsub.f32 %v1042, %v1043
        %v1045 = vld [vmem:[%s3] sm:$0xff]
        %v1046 = vld [vmem:[%s3 + $0x8] sm:$0xff]
        %v1047 = vld [vmem:[%s3 + $0x10] sm:$0xff]
        %v1048 = vld [vmem:[%s3 + $0x18] sm:$0xff]
        %vm1049 = vcmask 64512
        %v1051 = vsel %vm1049, %v1041, 0
        %1053 = vmatpush.msra.mxu0 0.0
        %1054 = vmatpush.msra.mxu0 0.0
        %1055 = vmatpush.msra.mxu0 0.0
        %1056 = vmatpush.msra.mxu0 0.0
        %1057 = vmatpush.msra.mxu0 0.0
        %1058 = vmatpush.msra.mxu0 0.0
        %1059 = vmatpush.msra.mxu0 0.0
        %1060 = vmatpush.msra.mxu0 0.0
        %1061 = vmatpush.msra.mxu0 0.0
        %1062 = vmatpush.msra.mxu0 0.0
        %1063 = vmatpush.msra.mxu0 0.0
        %1064 = vmatpush.msra.mxu0 0.0
        %1065 = vmatpush.msra.mxu0 0.0
        %1066 = vmatpush.msra.mxu0 0.0
        %1067 = vmatpush.msra.mxu0 0.0
        %1068 = vmatpush.msra.mxu0 %v1045
        %1069 = vmatmul.f32.gmra.mxu0 %v1051
        %v1070 = vpop.f32.mrf.mxu0
        %v1071 = vadd.f32 0.0, %v1070
        %1072 = vdwg.mxu0
        %1073 = vmatpush.msra.mxu0 0.0
        %1074 = vmatpush.msra.mxu0 0.0
        %1075 = vmatpush.msra.mxu0 0.0
        %1076 = vmatpush.msra.mxu0 0.0
        %1077 = vmatpush.msra.mxu0 0.0
        %1078 = vmatpush.msra.mxu0 0.0
        %1079 = vmatpush.msra.mxu0 0.0
        %1080 = vmatpush.msra.mxu0 0.0
        %1081 = vmatpush.msra.mxu0 0.0
        %1082 = vmatpush.msra.mxu0 0.0
        %1083 = vmatpush.msra.mxu0 0.0
        %1084 = vmatpush.msra.mxu0 0.0
        %1085 = vmatpush.msra.mxu0 0.0
        %1086 = vmatpush.msra.mxu0 0.0
        %1087 = vmatpush.msra.mxu0 0.0
        %1088 = vmatpush.msra.mxu0 %v1046
        %1089 = vmatmul.f32.gmra.mxu0 %v1051
        %v1090 = vpop.f32.mrf.mxu0
        %v1091 = vadd.f32 0.0, %v1090
        %1092 = vdwg.mxu0
        %1093 = vmatpush.msra.mxu0 0.0
        %1094 = vmatpush.msra.mxu0 0.0
        %1095 = vmatpush.msra.mxu0 0.0
        %1096 = vmatpush.msra.mxu0 0.0
        %1097 = vmatpush.msra.mxu0 0.0
        %1098 = vmatpush.msra.mxu0 0.0
        %1099 = vmatpush.msra.mxu0 0.0
        %1100 = vmatpush.msra.mxu0 0.0
        %1101 = vmatpush.msra.mxu0 0.0
        %1102 = vmatpush.msra.mxu0 0.0
        %1103 = vmatpush.msra.mxu0 0.0
        %1104 = vmatpush.msra.mxu0 0.0
        %1105 = vmatpush.msra.mxu0 0.0
        %1106 = vmatpush.msra.mxu0 0.0
        %1107 = vmatpush.msra.mxu0 0.0
        %1108 = vmatpush.msra.mxu0 %v1047
        %1109 = vmatmul.f32.gmra.mxu0 %v1051
        %v1110 = vpop.f32.mrf.mxu0
        %v1111 = vadd.f32 0.0, %v1110
        %1112 = vdwg.mxu0
        %1113 = vmatpush.msra.mxu0 0.0
        %1114 = vmatpush.msra.mxu0 0.0
        %1115 = vmatpush.msra.mxu0 0.0
        %1116 = vmatpush.msra.mxu0 0.0
        %1117 = vmatpush.msra.mxu0 0.0
        %1118 = vmatpush.msra.mxu0 0.0
        %1119 = vmatpush.msra.mxu0 0.0
        %1120 = vmatpush.msra.mxu0 0.0
        %1121 = vmatpush.msra.mxu0 0.0
        %1122 = vmatpush.msra.mxu0 0.0
        %1123 = vmatpush.msra.mxu0 0.0
        %1124 = vmatpush.msra.mxu0 0.0
        %1125 = vmatpush.msra.mxu0 0.0
        %1126 = vmatpush.msra.mxu0 0.0
        %1127 = vmatpush.msra.mxu0 0.0
        %1128 = vmatpush.msra.mxu0 %v1048
        %1129 = vmatmul.f32.gmra.mxu0 %v1051
        %v1130 = vpop.f32.mrf.mxu0
        %v1131 = vadd.f32 0.0, %v1130
        %1132 = vdwg.mxu0
        %v1134 = vsel %vm1049, %v1044, 0
        %1136 = vmatpush.msra.mxu0 0.0
        %1137 = vmatpush.msra.mxu0 0.0
        %1138 = vmatpush.msra.mxu0 0.0
        %1139 = vmatpush.msra.mxu0 0.0
        %1140 = vmatpush.msra.mxu0 0.0
        %1141 = vmatpush.msra.mxu0 0.0
        %1142 = vmatpush.msra.mxu0 0.0
        %1143 = vmatpush.msra.mxu0 0.0
        %1144 = vmatpush.msra.mxu0 0.0
        %1145 = vmatpush.msra.mxu0 0.0
        %1146 = vmatpush.msra.mxu0 0.0
        %1147 = vmatpush.msra.mxu0 0.0
        %1148 = vmatpush.msra.mxu0 0.0
        %1149 = vmatpush.msra.mxu0 0.0
        %1150 = vmatpush.msra.mxu0 0.0
        %1151 = vmatpush.msra.mxu0 %v1045
        %1152 = vmatmul.f32.gmra.mxu0 %v1134
        %v1153 = vpop.f32.mrf.mxu0
        %v1154 = vadd.f32 0.0, %v1153
        %1155 = vdwg.mxu0
        %1156 = vmatpush.msra.mxu0 0.0
        %1157 = vmatpush.msra.mxu0 0.0
        %1158 = vmatpush.msra.mxu0 0.0
        %1159 = vmatpush.msra.mxu0 0.0
        %1160 = vmatpush.msra.mxu0 0.0
        %1161 = vmatpush.msra.mxu0 0.0
        %1162 = vmatpush.msra.mxu0 0.0
        %1163 = vmatpush.msra.mxu0 0.0
        %1164 = vmatpush.msra.mxu0 0.0
        %1165 = vmatpush.msra.mxu0 0.0
        %1166 = vmatpush.msra.mxu0 0.0
        %1167 = vmatpush.msra.mxu0 0.0
        %1168 = vmatpush.msra.mxu0 0.0
        %1169 = vmatpush.msra.mxu0 0.0
        %1170 = vmatpush.msra.mxu0 0.0
        %1171 = vmatpush.msra.mxu0 %v1046
        %1172 = vmatmul.f32.gmra.mxu0 %v1134
        %v1173 = vpop.f32.mrf.mxu0
        %v1174 = vadd.f32 0.0, %v1173
        %1175 = vdwg.mxu0
        %1176 = vmatpush.msra.mxu0 0.0
        %1177 = vmatpush.msra.mxu0 0.0
        %1178 = vmatpush.msra.mxu0 0.0
        %1179 = vmatpush.msra.mxu0 0.0
        %1180 = vmatpush.msra.mxu0 0.0
        %1181 = vmatpush.msra.mxu0 0.0
        %1182 = vmatpush.msra.mxu0 0.0
        %1183 = vmatpush.msra.mxu0 0.0
        %1184 = vmatpush.msra.mxu0 0.0
        %1185 = vmatpush.msra.mxu0 0.0
        %1186 = vmatpush.msra.mxu0 0.0
        %1187 = vmatpush.msra.mxu0 0.0
        %1188 = vmatpush.msra.mxu0 0.0
        %1189 = vmatpush.msra.mxu0 0.0
        %1190 = vmatpush.msra.mxu0 0.0
        %1191 = vmatpush.msra.mxu0 %v1047
        %1192 = vmatmul.f32.gmra.mxu0 %v1134
        %v1193 = vpop.f32.mrf.mxu0
        %v1194 = vadd.f32 0.0, %v1193
        %1195 = vdwg.mxu0
        %1196 = vmatpush.msra.mxu0 0.0
        %1197 = vmatpush.msra.mxu0 0.0
        %1198 = vmatpush.msra.mxu0 0.0
        %1199 = vmatpush.msra.mxu0 0.0
        %1200 = vmatpush.msra.mxu0 0.0
        %1201 = vmatpush.msra.mxu0 0.0
        %1202 = vmatpush.msra.mxu0 0.0
        %1203 = vmatpush.msra.mxu0 0.0
        %1204 = vmatpush.msra.mxu0 0.0
        %1205 = vmatpush.msra.mxu0 0.0
        %1206 = vmatpush.msra.mxu0 0.0
        %1207 = vmatpush.msra.mxu0 0.0
        %1208 = vmatpush.msra.mxu0 0.0
        %1209 = vmatpush.msra.mxu0 0.0
        %1210 = vmatpush.msra.mxu0 0.0
        %1211 = vmatpush.msra.mxu0 %v1048
        %1212 = vmatmul.f32.gmra.mxu0 %v1134
        %v1213 = vpop.f32.mrf.mxu0
        %v1214 = vadd.f32 0.0, %v1213
        %1215 = vdwg.mxu0
        %v1216 = vld [vmem:[%s6] sm:$0xff]
        %v1217 = vld [vmem:[%s6 + $0x8] sm:$0xff]
        %v1218 = vld [vmem:[%s6 + $0x10] sm:$0xff]
        %v1219 = vld [vmem:[%s6 + $0x18] sm:$0xff]
        %v1220 = vld [vmem:[%s6 + $0x20] sm:$0xff]
        %v1221 = vld [vmem:[%s6 + $0x28] sm:$0xff]
        %v1222 = vld [vmem:[%s6 + $0x30] sm:$0xff]
        %v1223 = vld [vmem:[%s6 + $0x38] sm:$0xff]
        %v1224 = vld [vmem:[%s6 + $0x40] sm:$0xff]
        %v1225 = vld [vmem:[%s6 + $0x48] sm:$0xff]
        %v1226 = vld [vmem:[%s6 + $0x50] sm:$0xff]
        %v1227 = vld [vmem:[%s6 + $0x58] sm:$0xff]
        %v1228 = vld [vmem:[%s6 + $0x60] sm:$0xff]
        %v1229 = vld [vmem:[%s6 + $0x68] sm:$0xff]
        %v1230 = vld [vmem:[%s6 + $0x70] sm:$0xff]
        %v1231 = vld [vmem:[%s6 + $0x78] sm:$0xff]
        %v1232 = vperm.slane %v1071, 0
        %v1233 = vperm.slane %v1091, 0
        %v1234 = vperm.slane %v1111, 0
        %v1235 = vperm.slane %v1131, 0
        %v1236 = vmul.f32 %v1216, %v1232
        %v1237 = vmul.f32 %v1217, %v1233
        %v1238 = vmul.f32 %v1218, %v1234
        %v1239 = vmul.f32 %v1219, %v1235
        %v1240 = vmul.f32 %v1220, %v1232
        %v1241 = vmul.f32 %v1221, %v1233
        %v1242 = vmul.f32 %v1222, %v1234
        %v1243 = vmul.f32 %v1223, %v1235
        %v1244 = vmul.f32 %v1224, %v1232
        %v1245 = vmul.f32 %v1225, %v1233
        %v1246 = vmul.f32 %v1226, %v1234
        %v1247 = vmul.f32 %v1227, %v1235
        %v1248 = vmul.f32 %v1228, %v1232
        %v1249 = vmul.f32 %v1229, %v1233
        %v1250 = vmul.f32 %v1230, %v1234
        %v1251 = vmul.f32 %v1231, %v1235
        %v1252 = vperm.slane %v1154, 0
        %v1253 = vperm.slane %v1174, 0
        %v1254 = vperm.slane %v1194, 0
        %v1255 = vperm.slane %v1214, 0
        %v1256 = vadd.f32 %v1236, %v1252
        %v1257 = vadd.f32 %v1237, %v1253
        %v1258 = vadd.f32 %v1238, %v1254
        %v1259 = vadd.f32 %v1239, %v1255
        %v1260 = vadd.f32 %v1240, %v1252
        %v1261 = vadd.f32 %v1241, %v1253
        %v1262 = vadd.f32 %v1242, %v1254
        %v1263 = vadd.f32 %v1243, %v1255
        %v1264 = vadd.f32 %v1244, %v1252
        %v1265 = vadd.f32 %v1245, %v1253
        %v1266 = vadd.f32 %v1246, %v1254
        %v1267 = vadd.f32 %v1247, %v1255
        %v1268 = vadd.f32 %v1248, %v1252
        %v1269 = vadd.f32 %v1249, %v1253
        %v1270 = vadd.f32 %v1250, %v1254
        %v1271 = vadd.f32 %v1251, %v1255
        %v1272 = vmax.f32 %v1256, 0.0
        %v1273 = vmax.f32 %v1257, 0.0
        %v1274 = vmax.f32 %v1258, 0.0
        %v1275 = vmax.f32 %v1259, 0.0
        %v1276 = vmax.f32 %v1260, 0.0
        %v1277 = vmax.f32 %v1261, 0.0
        %v1278 = vmax.f32 %v1262, 0.0
        %v1279 = vmax.f32 %v1263, 0.0
        %v1280 = vmax.f32 %v1264, 0.0
        %v1281 = vmax.f32 %v1265, 0.0
        %v1282 = vmax.f32 %v1266, 0.0
        %v1283 = vmax.f32 %v1267, 0.0
        %v1284 = vmax.f32 %v1268, 0.0
        %v1285 = vmax.f32 %v1269, 0.0
        %v1286 = vmax.f32 %v1270, 0.0
        %v1287 = vmax.f32 %v1271, 0.0
        %1288 = vst [vmem:[%s6] sm:$0xff] %v1272
        %1289 = vst [vmem:[%s6 + $0x8] sm:$0xff] %v1273
        %1290 = vst [vmem:[%s6 + $0x10] sm:$0xff] %v1274
        %1291 = vst [vmem:[%s6 + $0x18] sm:$0xff] %v1275
        %1292 = vst [vmem:[%s6 + $0x20] sm:$0xff] %v1276
        %1293 = vst [vmem:[%s6 + $0x28] sm:$0xff] %v1277
        %1294 = vst [vmem:[%s6 + $0x30] sm:$0xff] %v1278
        %1295 = vst [vmem:[%s6 + $0x38] sm:$0xff] %v1279
        %1296 = vst [vmem:[%s6 + $0x40] sm:$0xff] %v1280
        %1297 = vst [vmem:[%s6 + $0x48] sm:$0xff] %v1281
        %1298 = vst [vmem:[%s6 + $0x50] sm:$0xff] %v1282
        %1299 = vst [vmem:[%s6 + $0x58] sm:$0xff] %v1283
        %1300 = vst [vmem:[%s6 + $0x60] sm:$0xff] %v1284
        %1301 = vst [vmem:[%s6 + $0x68] sm:$0xff] %v1285
        %1302 = vst [vmem:[%s6 + $0x70] sm:$0xff] %v1286
        %1303 = vst [vmem:[%s6 + $0x78] sm:$0xff] %v1287
      $region52: #{up_conv_forward.1} parent=43 // pred_fallthru
        _
      // Predicated region
      $region53: #{up_conv_forward.1} parent=43 // pred_check
        %p1304 = pneg %p161
      $region54: #{up_conv_forward.1} parent=43 // pred_check_branch
        %1306 = sbr.rel (%p1304) target = $region56
      $region55: #{up_conv_forward.1} parent=43 // pred_region
        _
      $region56: #{up_conv_forward.1} parent=43 // pred_fallthru
        _
      // Predicated region
      $region57: #{up_conv_forward.1} parent=43 // pred_check
        %p1307 = pneg %p161
      $region58: #{up_conv_forward.1} parent=43 // pred_check_branch
        %1309 = sbr.rel (%p1307) target = $region60
      $region59: #{up_conv_forward.1} parent=43 // pred_region
        _
      $region60: #{up_conv_forward.1} parent=43 // pred_fallthru
        _
    $region44: #{up_conv_forward.1} parent=5 // pred_fallthru
      _
    %p1310 = scmp.le.s32.totalorder 2, %s12
    // Predicated region
    $region61: #{up_conv_forward.1} parent=5 // pred_check
      %p1311 = pneg %p1310
    $region62: #{up_conv_forward.1} parent=5 // pred_check_branch
      %1313 = sbr.rel (%p1311) target = $region64
    $region63: #{up_conv_forward.1} parent=5 // pred_region
      %s1314 = ssub.s32 %s12, 2
    $region64: #{up_conv_forward.1} parent=5 // pred_fallthru
      _
  $region6: #{up_conv_forward.1} parent=0 // loop_footer
    %s16 = sadd.s32 1, %s12
  $region7: #{up_conv_forward.1} parent=0 // loop_footer_branch
    %11 = sbr.rel target = $region3
  $region8: #{up_conv_forward.1} parent=0 // loop_exit
    _

</llo_original>
